<compile_context>
chip_gen: v6e
topology: v6e:2x2x1
jax: 0.10.0
libtpu: 0.0.40
codegen_flags: <defaults>
</compile_context>

<pallas_src>
import functools

import jax
import jax.numpy as jnp
from jax.experimental import pallas as pl
from jax.experimental.pallas import tpu as pltpu

LANE = 128
# 48 MiB: well above v5e's 16 MiB scoped default, comfortably inside v7x's
# 64 MiB physical per-TC VMEM, plenty of room on v6e's 128 MiB.
VMEM_LIMIT = 48 * 1024 * 1024


def _rup(x, m):
    return ((x + m - 1) // m) * m


def _pad_to(a, shape):
    cfg = [(0, t - s) for s, t in zip(a.shape, shape)]
    if not any(p for _, p in cfg):
        return a
    return jnp.pad(a, cfg)


def _pick_tm(m, cap):
    """Row tile + padded M for the 1x1 kernels.  M is padded UP to a multiple
    of the chosen tile (caller slices back to M), so the grid never degrades
    to hundreds of tiny 8-row steps."""
    mp8 = _rup(m, 8)
    tm = min(_rup(cap, 8), mp8)
    return tm, _rup(mp8, tm)


def _pick_strip_rows(ho, wo, target_rows=1024):
    """Rows-per-strip for the fused 3x3 kernel: a divisor of Ho whose strip
    (SR*Wo output rows) is sublane-aligned and <= target; else whole image."""
    cands = [d for d in range(1, ho + 1)
             if ho % d == 0 and (d * wo) % 8 == 0 and d * wo <= target_rows]
    return max(cands) if cands else ho


# ----------------------------- Pallas kernels ------------------------------ #

def _conv1_kernel(x_ref, w1_ref, b1_ref, h1_ref):
    # x is already bf16; accumulate in f32.
    h = jnp.dot(x_ref[...], w1_ref[...], preferred_element_type=jnp.float32)
    h1_ref[...] = jnp.maximum(h + b1_ref[...], 0.0).astype(h1_ref.dtype)


def _conv1_sc_kernel(x_ref, w1_ref, b1_ref, ws_ref, bs_ref, h1_ref, sc_ref):
    # Fused: conv1(1x1)+BN+ReLU  and  projection shortcut(1x1)+BN.
    xb = x_ref[...]
    h = jnp.dot(xb, w1_ref[...], preferred_element_type=jnp.float32)
    h1_ref[...] = jnp.maximum(h + b1_ref[...], 0.0).astype(h1_ref.dtype)
    s = jnp.dot(xb, ws_ref[...], preferred_element_type=jnp.float32)
    sc_ref[...] = (s + bs_ref[...]).astype(sc_ref.dtype)


def _conv2_conv3_kernel(x_ref, w2_ref, b2_ref, w3_ref, b3_ref, r_ref, o_ref,
                        *, SR, W):
    # x_ref : (1, SR+2, W+2, C)   bf16 halo-padded row strip of h1
    # w2_ref: (3, 3*C, Cmid)      bf16, K-packed per ky over the 3 kx taps
    # w3_ref: (Cmid, Cout)        bf16
    # r_ref : (1, SR*W, Cout)     bf16 residual strip
    # o_ref : (1, SR*W, Cout)     f32
    x = x_ref[0]
    c = x.shape[-1]
    # Build the 3 kx-shifted slabs ONCE and pack them along channels (K=3*C).
    slab = jnp.concatenate(
        [x[:, 0:W, :], x[:, 1:W + 1, :], x[:, 2:W + 2, :]], axis=-1)
    acc = None
    for ky in range(3):                       # 3 matmuls, K = 3*C each
        patch = slab[ky:ky + SR].reshape(SR * W, 3 * c)
        part = jnp.dot(patch, w2_ref[ky], preferred_element_type=jnp.float32)
        acc = part if acc is None else acc + part
    h2 = jnp.maximum(acc + b2_ref[...], 0.0).astype(jnp.bfloat16)
    y = jnp.dot(h2, w3_ref[...], preferred_element_type=jnp.float32)
    y = y + b3_ref[...] + r_ref[0].astype(jnp.float32)
    o_ref[0] = jnp.maximum(y, 0.0).astype(o_ref.dtype)


# ----------------------------- kernel wrappers ------------------------------ #

def _cparams(n_parallel=1):
    return pltpu.CompilerParams(
        dimension_semantics=("parallel",) * n_parallel,
        vmem_limit_bytes=VMEM_LIMIT)


def conv1_and_shortcut(x_flat, w1, b1, ws=None, bs=None, tm=512):
    """h1 = relu(x@w1+b1) [bf16]; optionally sc = x@ws+bs [bf16]."""
    M, cin_p = x_flat.shape
    hid_p = w1.shape[1]
    tmv, mp = _pick_tm(M, tm)
    xp = x_flat if mp == M else jnp.pad(x_flat, ((0, mp - M), (0, 0)))
    grid = (mp // tmv,)
    x_spec = pl.BlockSpec((tmv, cin_p), lambda i: (i, 0))

    if ws is None:
        h1 = pl.pallas_call(
            _conv1_kernel,
            out_shape=jax.ShapeDtypeStruct((mp, hid_p), jnp.bfloat16),
            grid=grid,
            in_specs=[x_spec,
                      pl.BlockSpec((cin_p, hid_p), lambda i: (0, 0)),
                      pl.BlockSpec((1, hid_p), lambda i: (0, 0))],
            out_specs=pl.BlockSpec((tmv, hid_p), lambda i: (i, 0)),
            compiler_params=_cparams(),
        )(xp, w1, b1)
        return h1[:M] if mp != M else h1

    out_p = ws.shape[1]
    h1, sc = pl.pallas_call(
        _conv1_sc_kernel,
        out_shape=(jax.ShapeDtypeStruct((mp, hid_p), jnp.bfloat16),
                   jax.ShapeDtypeStruct((mp, out_p), jnp.bfloat16)),
        grid=grid,
        in_specs=[x_spec,
                  pl.BlockSpec((cin_p, hid_p), lambda i: (0, 0)),
                  pl.BlockSpec((1, hid_p), lambda i: (0, 0)),
                  pl.BlockSpec((cin_p, out_p), lambda i: (0, 0)),
                  pl.BlockSpec((1, out_p), lambda i: (0, 0))],
        out_specs=(pl.BlockSpec((tmv, hid_p), lambda i: (i, 0)),
                   pl.BlockSpec((tmv, out_p), lambda i: (i, 0))),
        compiler_params=_cparams(),
    )(xp, w1, b1, ws, bs)
    if mp != M:
        h1, sc = h1[:M], sc[:M]
    return h1, sc


def conv2_conv3_residual(h1, sc, w2p, b2, w3, b3, N, Ho, Wo):
    """y = relu( conv3(relu(conv2_3x3(h1)+b2)) + b3 + sc )   [f32].

    conv2 (3x3, pad 1) + BN + ReLU, conv3 (1x1) + BN, residual add and the
    final ReLU are all fused; the grid runs over batch x spatial row strips.
    """
    M, hid_p = h1.shape
    out_p = w3.shape[1]
    SR = _pick_strip_rows(Ho, Wo)
    ns = Ho // SR
    Wp2 = Wo + 2

    h1p = jnp.pad(h1.reshape(N, Ho, Wo, hid_p),
                  ((0, 0), (1, 1), (1, 1), (0, 0)))
    if ns == 1:
        strips = h1p                                       # (N, Ho+2, Wo+2, C)
    else:
        strips = jnp.stack(
            [h1p[:, i * SR:i * SR + SR + 2] for i in range(ns)], axis=1
        ).reshape(N * ns, SR + 2, Wp2, hid_p)
    res3 = sc.reshape(N * ns, SR * Wo, out_p)

    y = pl.pallas_call(
        functools.partial(_conv2_conv3_kernel, SR=SR, W=Wo),
        out_shape=jax.ShapeDtypeStruct((N * ns, SR * Wo, out_p), jnp.float32),
        grid=(N * ns,),
        in_specs=[pl.BlockSpec((1, SR + 2, Wp2, hid_p),
                               lambda i: (i, 0, 0, 0)),
                  pl.BlockSpec((3, 3 * hid_p, hid_p), lambda i: (0, 0, 0)),
                  pl.BlockSpec((1, hid_p), lambda i: (0, 0)),
                  pl.BlockSpec((hid_p, out_p), lambda i: (0, 0)),
                  pl.BlockSpec((1, out_p), lambda i: (0, 0)),
                  pl.BlockSpec((1, SR * Wo, out_p), lambda i: (i, 0, 0))],
        out_specs=pl.BlockSpec((1, SR * Wo, out_p), lambda i: (i, 0, 0)),
        compiler_params=_cparams(),
    )(strips, w2p, b2, w3, b3, res3)
    return y.reshape(M, out_p)


# ------------------------------ JAX glue ----------------------------------- #

def fold_bn(w_mat, conv_b, gamma, beta, mean, var, eps=1e-5):
    """Fold eval-mode BatchNorm into matmul-form weight (..., Cout) + bias."""
    scale = gamma / jnp.sqrt(var + eps)
    w_f = w_mat * scale            # broadcast over last (output-channel) dim
    b_f = (conv_b - mean) * scale + beta
    return w_f, b_f


def resnet_bottleneck_forward(x_nchw, params, downsample, tm=512):
    N, Cin, H, W = x_nchw.shape
    hid = params["conv1_w"].shape[0]
    Cout = params["conv3_w"].shape[0]
    stride = 2 if downsample else 1
    proj = downsample or (Cin != Cout)

    cin_p, hid_p, out_p = _rup(Cin, LANE), _rup(hid, LANE), _rup(Cout, LANE)

    # NCHW -> NHWC, stride subsample, lane-pad channels, flatten, cast bf16
    # (stride before a 1x1 conv == striding the conv) — one fused XLA copy.
    x = jnp.transpose(x_nchw, (0, 2, 3, 1))[:, ::stride, ::stride, :]
    Ho, Wo = x.shape[1], x.shape[2]
    x = jnp.pad(x, ((0, 0), (0, 0), (0, 0), (0, cin_p - Cin)))
    x_flat = x.reshape(N * Ho * Wo, cin_p).astype(jnp.bfloat16)

    # Fold BN into weights, pad to lane-dense channel counts, cast to bf16.
    w1, b1 = fold_bn(params["conv1_w"][:, :, 0, 0].T, params["conv1_b"],
                     params["bn1_gamma"], params["bn1_beta"],
                     params["bn1_mean"], params["bn1_var"])
    w1 = _pad_to(w1, (cin_p, hid_p)).astype(jnp.bfloat16)
    b1 = _pad_to(b1, (hid_p,)).reshape(1, hid_p)

    w2, b2 = fold_bn(params["conv2_w"].transpose(2, 3, 1, 0), params["conv2_b"],
                     params["bn2_gamma"], params["bn2_beta"],
                     params["bn2_mean"], params["bn2_var"])       # (3,3,in,out)
    # K-pack: per-ky slab of shape (3*Cin, Cout), matching the in-kernel concat.
    w2 = _pad_to(w2, (3, 3, hid_p, hid_p)).reshape(3, 3 * hid_p, hid_p)
    w2 = w2.astype(jnp.bfloat16)
    b2 = _pad_to(b2, (hid_p,)).reshape(1, hid_p)

    w3, b3 = fold_bn(params["conv3_w"][:, :, 0, 0].T, params["conv3_b"],
                     params["bn3_gamma"], params["bn3_beta"],
                     params["bn3_mean"], params["bn3_var"])
    w3 = _pad_to(w3, (hid_p, out_p)).astype(jnp.bfloat16)
    b3 = _pad_to(b3, (out_p,)).reshape(1, out_p)

    # conv1 (+ projection shortcut) fused: x tile read once from HBM.
    if proj:
        ws, bs = fold_bn(params["sc_w"][:, :, 0, 0].T, params["sc_b"],
                         params["bns_gamma"], params["bns_beta"],
                         params["bns_mean"], params["bns_var"])
        ws = _pad_to(ws, (cin_p, out_p)).astype(jnp.bfloat16)
        bs = _pad_to(bs, (out_p,)).reshape(1, out_p)
        h1, sc = conv1_and_shortcut(x_flat, w1, b1, ws, bs, tm=tm)
    else:
        h1 = conv1_and_shortcut(x_flat, w1, b1, tm=tm)
        sc = x_flat                                     # identity (cin_p==out_p)

    # conv2 (3x3) + BN + ReLU + conv3 (1x1) + BN + residual + ReLU, fused.
    y = conv2_conv3_residual(h1, sc, w2, b2, w3, b3, N, Ho, Wo)

    y = y.reshape(N, Ho, Wo, out_p)[..., :Cout]
    return jnp.transpose(y, (0, 3, 1, 2))                        # back to NCHW


# --------------------------- pure-JAX reference ----------------------------- #

def _conv(x, w, b, stride=1, padding=0):
    out = jax.lax.conv_general_dilated(
        x, w, (stride, stride), [(padding, padding), (padding, padding)],
        dimension_numbers=("NCHW", "OIHW", "NCHW"))
    return out + b[None, :, None, None]


def _bn(x, g, bta, m, v, eps=1e-5):
    inv = g / jnp.sqrt(v + eps)
    return (x - m[None, :, None, None]) * inv[None, :, None, None] \
        + bta[None, :, None, None]


def ref_forward(x, p, downsample):
    stride = 2 if downsample else 1
    r = jax.nn.relu(_bn(_conv(x, p["conv1_w"], p["conv1_b"], stride, 0),
                        p["bn1_gamma"], p["bn1_beta"], p["bn1_mean"], p["bn1_var"]))
    r = jax.nn.relu(_bn(_conv(r, p["conv2_w"], p["conv2_b"], 1, 1),
                        p["bn2_gamma"], p["bn2_beta"], p["bn2_mean"], p["bn2_var"]))
    r = _bn(_conv(r, p["conv3_w"], p["conv3_b"], 1, 0),
            p["bn3_gamma"], p["bn3_beta"], p["bn3_mean"], p["bn3_var"])
    Cin, Cout = x.shape[1], p["conv3_w"].shape[0]
    if downsample or Cin != Cout:
        sc = _bn(_conv(x, p["sc_w"], p["sc_b"], stride, 0),
                 p["bns_gamma"], p["bns_beta"], p["bns_mean"], p["bns_var"])
    else:
        sc = x
    return jax.nn.relu(r + sc)


# --------------------------------- main ------------------------------------ #

def make_params(key, in_c, hid_c, out_c, downsample):
    ks = jax.random.split(key, 16)
    def w(k, shape): return 0.1 * jax.random.normal(k, shape, jnp.float32)
    def bn(k, c):
        k1, k2, k3, k4 = jax.random.split(k, 4)
        return dict(gamma=1.0 + 0.1 * jax.random.normal(k1, (c,)),
                    beta=0.1 * jax.random.normal(k2, (c,)),
                    mean=0.1 * jax.random.normal(k3, (c,)),
                    var=0.5 + jax.random.uniform(k4, (c,)))
    p = {}
    p["conv1_w"] = w(ks[0], (hid_c, in_c, 1, 1)); p["conv1_b"] = w(ks[1], (hid_c,))
    p["conv2_w"] = w(ks[2], (hid_c, hid_c, 3, 3)); p["conv2_b"] = w(ks[3], (hid_c,))
    p["conv3_w"] = w(ks[4], (out_c, hid_c, 1, 1)); p["conv3_b"] = w(ks[5], (out_c,))
    for name, k, c in [("bn1", ks[6], hid_c), ("bn2", ks[7], hid_c),
                       ("bn3", ks[8], out_c)]:
        d = bn(k, c)
        for s in ("gamma", "beta", "mean", "var"):
            p[f"{name}_{s}"] = d[s]
    if downsample or in_c != out_c:
        p["sc_w"] = w(ks[9], (out_c, in_c, 1, 1)); p["sc_b"] = w(ks[10], (out_c,))
        d = bn(ks[11], out_c)
        for s in ("gamma", "beta", "mean", "var"):
            p[f"bns_{s}"] = d[s]
    return p


if __name__ == "__main__":
    # --- projection-shortcut path (downsample) ---
    in_channels, hidden_channels, out_channels = 8, 4, 16
    downsample = True
    N, H, W = 2, 16, 16

    x = jax.random.normal(jax.random.PRNGKey(0), (N, in_channels, H, W),
                          jnp.float32)
    params = make_params(jax.random.PRNGKey(42), in_channels, hidden_channels,
                         out_channels, downsample)

    fwd = jax.jit(functools.partial(resnet_bottleneck_forward,
                                    downsample=downsample))
    y = jax.block_until_ready(fwd(x, params))
    y_ref = jax.block_until_ready(ref_forward(x, params, downsample))
    assert y.shape == y_ref.shape, (y.shape, y_ref.shape)
    # bf16 MXU inputs / bf16 activations with f32 accumulation -> loose tol.
    assert jnp.allclose(y, y_ref, rtol=5e-2, atol=5e-2), \
        float(jnp.max(jnp.abs(y - y_ref)))

    # --- identity-shortcut path (no downsample, in == out) ---
    in2, hid2, out2 = 16, 4, 16
    params2 = make_params(jax.random.PRNGKey(7), in2, hid2, out2, False)
    x2 = jax.random.normal(jax.random.PRNGKey(1), (2, in2, 8, 8), jnp.float32)
    fwd2 = jax.jit(functools.partial(resnet_bottleneck_forward,
                                     downsample=False))
    y2 = jax.block_until_ready(fwd2(x2, params2))
    y2_ref = jax.block_until_ready(ref_forward(x2, params2, False))
    assert y2.shape == y2_ref.shape, (y2.shape, y2_ref.shape)
    assert jnp.allclose(y2, y2_ref, rtol=5e-2, atol=5e-2), \
        float(jnp.max(jnp.abs(y2 - y2_ref)))

    print("KERNEL_OK")
</pallas_src>

<mosaic_0001>
module attributes {stable_mosaic.version = 11 : i64} {
  func.func @_conv1_sc_kernel(%arg0: i32, %arg1: memref<128x128xbf16, #tpu.memory_space<vmem>>, %arg2: memref<128x128xbf16, #tpu.memory_space<vmem>>, %arg3: memref<1x128xf32, #tpu.memory_space<vmem>>, %arg4: memref<128x128xbf16, #tpu.memory_space<vmem>>, %arg5: memref<1x128xf32, #tpu.memory_space<vmem>>, %arg6: memref<128x128xbf16, #tpu.memory_space<vmem>>, %arg7: memref<128x128xbf16, #tpu.memory_space<vmem>>) attributes {dimension_semantics = [#tpu.dimension_semantics<parallel>], iteration_bounds = array<i64: 1>, scalar_prefetch = 0 : i64, scratch_operands = 0 : i64, tpu.core_type = #tpu.core_type<tc>, window_params = [{transform_indices = @transform_0, window_bounds = array<i64: 128, 128>}, {pipeline_mode = #tpu.pipeline_mode<synchronous>, transform_indices = @transform_1, window_bounds = array<i64: 128, 128>}, {pipeline_mode = #tpu.pipeline_mode<synchronous>, transform_indices = @transform_2, window_bounds = array<i64: 1, 128>}, {pipeline_mode = #tpu.pipeline_mode<synchronous>, transform_indices = @transform_3, window_bounds = array<i64: 128, 128>}, {pipeline_mode = #tpu.pipeline_mode<synchronous>, transform_indices = @transform_4, window_bounds = array<i64: 1, 128>}, {transform_indices = @transform_5, window_bounds = array<i64: 128, 128>}, {transform_indices = @transform_6, window_bounds = array<i64: 128, 128>}]} {
    %c0 = arith.constant 0 : index
    %c0_0 = arith.constant 0 : index
    %0 = vector.load %arg1[%c0, %c0_0] : memref<128x128xbf16, #tpu.memory_space<vmem>>, vector<128x128xbf16>
    %c0_1 = arith.constant 0 : index
    %c0_2 = arith.constant 0 : index
    %1 = vector.load %arg2[%c0_1, %c0_2] : memref<128x128xbf16, #tpu.memory_space<vmem>>, vector<128x128xbf16>
    %cst = arith.constant dense<0.000000e+00> : vector<128x128xf32>
    %2 = tpu.matmul %0, %1, %cst {dimension_numbers = #tpu.dot_dimension_numbers<[1], [0], [0], [1], [0, 0, 1, 1], [], []>} : vector<128x128xbf16>, vector<128x128xbf16>, vector<128x128xf32> -> vector<128x128xf32>
    %c0_3 = arith.constant 0 : index
    %c0_4 = arith.constant 0 : index
    %3 = vector.load %arg3[%c0_3, %c0_4] : memref<1x128xf32, #tpu.memory_space<vmem>>, vector<1x128xf32>
    %4 = vector.broadcast %3 : vector<1x128xf32> to vector<128x128xf32>
    %5 = arith.addf %2, %4 : vector<128x128xf32>
    %cst_5 = arith.constant 0.000000e+00 : f32
    %6 = vector.broadcast %cst_5 : f32 to vector<128x128xf32>
    %7 = arith.maximumf %5, %6 : vector<128x128xf32>
    %8 = arith.truncf %7 : vector<128x128xf32> to vector<128x128xbf16>
    %c0_6 = arith.constant 0 : index
    %c0_7 = arith.constant 0 : index
    %9 = vector.load %arg6[%c0_6, %c0_7] : memref<128x128xbf16, #tpu.memory_space<vmem>>, vector<128x128xbf16>
    tpu.vector_store %arg6[%c0_6, %c0_7], %8 {strides = array<i32>} : memref<128x128xbf16, #tpu.memory_space<vmem>>, vector<128x128xbf16>,
    %c0_8 = arith.constant 0 : index
    %c0_9 = arith.constant 0 : index
    %10 = vector.load %arg4[%c0_8, %c0_9] : memref<128x128xbf16, #tpu.memory_space<vmem>>, vector<128x128xbf16>
    %cst_10 = arith.constant dense<0.000000e+00> : vector<128x128xf32>
    %11 = tpu.matmul %0, %10, %cst_10 {dimension_numbers = #tpu.dot_dimension_numbers<[1], [0], [0], [1], [0, 0, 1, 1], [], []>} : vector<128x128xbf16>, vector<128x128xbf16>, vector<128x128xf32> -> vector<128x128xf32>
    %c0_11 = arith.constant 0 : index
    %c0_12 = arith.constant 0 : index
    %12 = vector.load %arg5[%c0_11, %c0_12] : memref<1x128xf32, #tpu.memory_space<vmem>>, vector<1x128xf32>
    %13 = vector.broadcast %12 : vector<1x128xf32> to vector<128x128xf32>
    %14 = arith.addf %11, %13 : vector<128x128xf32>
    %15 = arith.truncf %14 : vector<128x128xf32> to vector<128x128xbf16>
    %c0_13 = arith.constant 0 : index
    %c0_14 = arith.constant 0 : index
    %16 = vector.load %arg7[%c0_13, %c0_14] : memref<128x128xbf16, #tpu.memory_space<vmem>>, vector<128x128xbf16>
    tpu.vector_store %arg7[%c0_13, %c0_14], %15 {strides = array<i32>} : memref<128x128xbf16, #tpu.memory_space<vmem>>, vector<128x128xbf16>,
    return
  }
  func.func @transform_0(%arg0: i32) -> (i32, i32) {
    %c0_i32 = arith.constant 0 : i32
    %c0_i32_0 = arith.constant 0 : i32
    return %arg0, %c0_i32 : i32, i32
  }
  func.func @transform_1(%arg0: i32) -> (i32, i32) {
    %c0_i32 = arith.constant 0 : i32
    %c0_i32_0 = arith.constant 0 : i32
    %c0_i32_1 = arith.constant 0 : i32
    return %c0_i32, %c0_i32_0 : i32, i32
  }
  func.func @transform_2(%arg0: i32) -> (i32, i32) {
    %c0_i32 = arith.constant 0 : i32
    %c0_i32_0 = arith.constant 0 : i32
    %c0_i32_1 = arith.constant 0 : i32
    return %c0_i32, %c0_i32_0 : i32, i32
  }
  func.func @transform_3(%arg0: i32) -> (i32, i32) {
    %c0_i32 = arith.constant 0 : i32
    %c0_i32_0 = arith.constant 0 : i32
    %c0_i32_1 = arith.constant 0 : i32
    return %c0_i32, %c0_i32_0 : i32, i32
  }
  func.func @transform_4(%arg0: i32) -> (i32, i32) {
    %c0_i32 = arith.constant 0 : i32
    %c0_i32_0 = arith.constant 0 : i32
    %c0_i32_1 = arith.constant 0 : i32
    return %c0_i32, %c0_i32_0 : i32, i32
  }
  func.func @transform_5(%arg0: i32) -> (i32, i32) {
    %c0_i32 = arith.constant 0 : i32
    %c0_i32_0 = arith.constant 0 : i32
    return %arg0, %c0_i32 : i32, i32
  }
  func.func @transform_6(%arg0: i32) -> (i32, i32) {
    %c0_i32 = arith.constant 0 : i32
    %c0_i32_0 = arith.constant 0 : i32
    return %arg0, %c0_i32 : i32, i32
  }
}

module attributes {stable_mosaic.version = 11 : i64} {
  func.func @_conv2_conv3_kernel(%arg0: i32, %arg1: memref<1x10x10x128xbf16, #tpu.memory_space<vmem>>, %arg2: memref<3x384x128xbf16, #tpu.memory_space<vmem>>, %arg3: memref<1x128xf32, #tpu.memory_space<vmem>>, %arg4: memref<128x128xbf16, #tpu.memory_space<vmem>>, %arg5: memref<1x128xf32, #tpu.memory_space<vmem>>, %arg6: memref<1x64x128xbf16, #tpu.memory_space<vmem>>, %arg7: memref<1x64x128xf32, #tpu.memory_space<vmem>>) attributes {dimension_semantics = [#tpu.dimension_semantics<parallel>], iteration_bounds = array<i64: 2>, scalar_prefetch = 0 : i64, scratch_operands = 0 : i64, tpu.core_type = #tpu.core_type<tc>, window_params = [{transform_indices = @transform_0, window_bounds = array<i64: 1, 10, 10, 128>}, {pipeline_mode = #tpu.pipeline_mode<synchronous>, transform_indices = @transform_1, window_bounds = array<i64: 3, 384, 128>}, {pipeline_mode = #tpu.pipeline_mode<synchronous>, transform_indices = @transform_2, window_bounds = array<i64: 1, 128>}, {pipeline_mode = #tpu.pipeline_mode<synchronous>, transform_indices = @transform_3, window_bounds = array<i64: 128, 128>}, {pipeline_mode = #tpu.pipeline_mode<synchronous>, transform_indices = @transform_4, window_bounds = array<i64: 1, 128>}, {transform_indices = @transform_5, window_bounds = array<i64: 1, 64, 128>}, {transform_indices = @transform_6, window_bounds = array<i64: 1, 64, 128>}]} {
    %c0 = arith.constant 0 : index
    %c0_0 = arith.constant 0 : index
    %c0_1 = arith.constant 0 : index
    %c0_2 = arith.constant 0 : index
    %0 = vector.load %arg1[%c0, %c0_0, %c0_1, %c0_2] : memref<1x10x10x128xbf16, #tpu.memory_space<vmem>>, vector<1x10x10x128xbf16>
    %1 = vector.shape_cast %0 : vector<1x10x10x128xbf16> to vector<10x10x128xbf16>
    %2 = vector.extract_strided_slice %1 {offsets = [0, 0, 0], sizes = [10, 8, 128], strides = [1, 1, 1]} : vector<10x10x128xbf16> to vector<10x8x128xbf16>
    %3 = vector.extract_strided_slice %1 {offsets = [0, 1, 0], sizes = [10, 8, 128], strides = [1, 1, 1]} : vector<10x10x128xbf16> to vector<10x8x128xbf16>
    %4 = vector.extract_strided_slice %1 {offsets = [0, 2, 0], sizes = [10, 8, 128], strides = [1, 1, 1]} : vector<10x10x128xbf16> to vector<10x8x128xbf16>
    %5 = tpu.concatenate %2, %3, %4 in 2 : vector<10x8x128xbf16>, vector<10x8x128xbf16>, vector<10x8x128xbf16> -> vector<10x8x384xbf16>
    %6 = vector.extract_strided_slice %5 {offsets = [0, 0, 0], sizes = [8, 8, 384], strides = [1, 1, 1]} : vector<10x8x384xbf16> to vector<8x8x384xbf16>
    %7 = vector.shape_cast %6 : vector<8x8x384xbf16> to vector<64x384xbf16>
    %c0_3 = arith.constant 0 : index
    %c0_4 = arith.constant 0 : index
    %c0_5 = arith.constant 0 : index
    %8 = vector.load %arg2[%c0_3, %c0_4, %c0_5] : memref<3x384x128xbf16, #tpu.memory_space<vmem>>, vector<1x384x128xbf16>
    %9 = vector.shape_cast %8 : vector<1x384x128xbf16> to vector<384x128xbf16>
    %cst = arith.constant dense<0.000000e+00> : vector<64x128xf32>
    %10 = tpu.matmul %7, %9, %cst {dimension_numbers = #tpu.dot_dimension_numbers<[1], [0], [0], [1], [0, 0, 1, 1], [], []>} : vector<64x384xbf16>, vector<384x128xbf16>, vector<64x128xf32> -> vector<64x128xf32>
    %11 = vector.extract_strided_slice %5 {offsets = [1, 0, 0], sizes = [8, 8, 384], strides = [1, 1, 1]} : vector<10x8x384xbf16> to vector<8x8x384xbf16>
    %12 = vector.shape_cast %11 : vector<8x8x384xbf16> to vector<64x384xbf16>
    %c1 = arith.constant 1 : index
    %c0_6 = arith.constant 0 : index
    %c0_7 = arith.constant 0 : index
    %13 = vector.load %arg2[%c1, %c0_6, %c0_7] : memref<3x384x128xbf16, #tpu.memory_space<vmem>>, vector<1x384x128xbf16>
    %14 = vector.shape_cast %13 : vector<1x384x128xbf16> to vector<384x128xbf16>
    %cst_8 = arith.constant dense<0.000000e+00> : vector<64x128xf32>
    %15 = tpu.matmul %12, %14, %cst_8 {dimension_numbers = #tpu.dot_dimension_numbers<[1], [0], [0], [1], [0, 0, 1, 1], [], []>} : vector<64x384xbf16>, vector<384x128xbf16>, vector<64x128xf32> -> vector<64x128xf32>
    %16 = arith.addf %10, %15 : vector<64x128xf32>
    %17 = vector.extract_strided_slice %5 {offsets = [2, 0, 0], sizes = [8, 8, 384], strides = [1, 1, 1]} : vector<10x8x384xbf16> to vector<8x8x384xbf16>
    %18 = vector.shape_cast %17 : vector<8x8x384xbf16> to vector<64x384xbf16>
    %c2 = arith.constant 2 : index
    %c0_9 = arith.constant 0 : index
    %c0_10 = arith.constant 0 : index
    %19 = vector.load %arg2[%c2, %c0_9, %c0_10] : memref<3x384x128xbf16, #tpu.memory_space<vmem>>, vector<1x384x128xbf16>
    %20 = vector.shape_cast %19 : vector<1x384x128xbf16> to vector<384x128xbf16>
    %cst_11 = arith.constant dense<0.000000e+00> : vector<64x128xf32>
    %21 = tpu.matmul %18, %20, %cst_11 {dimension_numbers = #tpu.dot_dimension_numbers<[1], [0], [0], [1], [0, 0, 1, 1], [], []>} : vector<64x384xbf16>, vector<384x128xbf16>, vector<64x128xf32> -> vector<64x128xf32>
    %22 = arith.addf %16, %21 : vector<64x128xf32>
    %c0_12 = arith.constant 0 : index
    %c0_13 = arith.constant 0 : index
    %23 = vector.load %arg3[%c0_12, %c0_13] : memref<1x128xf32, #tpu.memory_space<vmem>>, vector<1x128xf32>
    %24 = vector.broadcast %23 : vector<1x128xf32> to vector<64x128xf32>
    %25 = arith.addf %22, %24 : vector<64x128xf32>
    %cst_14 = arith.constant 0.000000e+00 : f32
    %26 = vector.broadcast %cst_14 : f32 to vector<64x128xf32>
    %27 = arith.maximumf %25, %26 : vector<64x128xf32>
    %28 = arith.truncf %27 : vector<64x128xf32> to vector<64x128xbf16>
    %c0_15 = arith.constant 0 : index
    %c0_16 = arith.constant 0 : index
    %29 = vector.load %arg4[%c0_15, %c0_16] : memref<128x128xbf16, #tpu.memory_space<vmem>>, vector<128x128xbf16>
    %cst_17 = arith.constant dense<0.000000e+00> : vector<64x128xf32>
    %30 = tpu.matmul %28, %29, %cst_17 {dimension_numbers = #tpu.dot_dimension_numbers<[1], [0], [0], [1], [0, 0, 1, 1], [], []>} : vector<64x128xbf16>, vector<128x128xbf16>, vector<64x128xf32> -> vector<64x128xf32>
    %c0_18 = arith.constant 0 : index
    %c0_19 = arith.constant 0 : index
    %31 = vector.load %arg5[%c0_18, %c0_19] : memref<1x128xf32, #tpu.memory_space<vmem>>, vector<1x128xf32>
    %32 = vector.broadcast %31 : vector<1x128xf32> to vector<64x128xf32>
    %33 = arith.addf %30, %32 : vector<64x128xf32>
    %c0_20 = arith.constant 0 : index
    %c0_21 = arith.constant 0 : index
    %c0_22 = arith.constant 0 : index
    %34 = vector.load %arg6[%c0_20, %c0_21, %c0_22] : memref<1x64x128xbf16, #tpu.memory_space<vmem>>, vector<1x64x128xbf16>
    %35 = vector.shape_cast %34 : vector<1x64x128xbf16> to vector<64x128xbf16>
    %36 = arith.extf %35 : vector<64x128xbf16> to vector<64x128xf32>
    %37 = arith.addf %33, %36 : vector<64x128xf32>
    %cst_23 = arith.constant 0.000000e+00 : f32
    %38 = vector.broadcast %cst_23 : f32 to vector<64x128xf32>
    %39 = arith.maximumf %37, %38 : vector<64x128xf32>
    %c0_24 = arith.constant 0 : index
    %c0_25 = arith.constant 0 : index
    %c0_26 = arith.constant 0 : index
    %40 = vector.load %arg7[%c0_24, %c0_25, %c0_26] : memref<1x64x128xf32, #tpu.memory_space<vmem>>, vector<1x64x128xf32>
    %41 = vector.shape_cast %40 : vector<1x64x128xf32> to vector<64x128xf32>
    %42 = vector.shape_cast %39 : vector<64x128xf32> to vector<1x64x128xf32>
    tpu.vector_store %arg7[%c0_24, %c0_25, %c0_26], %42 {strides = array<i32>} : memref<1x64x128xf32, #tpu.memory_space<vmem>>, vector<1x64x128xf32>,
    return
  }
  func.func @transform_0(%arg0: i32) -> (i32, i32, i32, i32) {
    %c0_i32 = arith.constant 0 : i32
    %c0_i32_0 = arith.constant 0 : i32
    %c0_i32_1 = arith.constant 0 : i32
    %c0_i32_2 = arith.constant 0 : i32
    return %arg0, %c0_i32, %c0_i32_0, %c0_i32_1 : i32, i32, i32, i32
  }
  func.func @transform_1(%arg0: i32) -> (i32, i32, i32) {
    %c0_i32 = arith.constant 0 : i32
    %c0_i32_0 = arith.constant 0 : i32
    %c0_i32_1 = arith.constant 0 : i32
    %c0_i32_2 = arith.constant 0 : i32
    return %c0_i32, %c0_i32_0, %c0_i32_1 : i32, i32, i32
  }
  func.func @transform_2(%arg0: i32) -> (i32, i32) {
    %c0_i32 = arith.constant 0 : i32
    %c0_i32_0 = arith.constant 0 : i32
    %c0_i32_1 = arith.constant 0 : i32
    return %c0_i32, %c0_i32_0 : i32, i32
  }
  func.func @transform_3(%arg0: i32) -> (i32, i32) {
    %c0_i32 = arith.constant 0 : i32
    %c0_i32_0 = arith.constant 0 : i32
    %c0_i32_1 = arith.constant 0 : i32
    return %c0_i32, %c0_i32_0 : i32, i32
  }
  func.func @transform_4(%arg0: i32) -> (i32, i32) {
    %c0_i32 = arith.constant 0 : i32
    %c0_i32_0 = arith.constant 0 : i32
    %c0_i32_1 = arith.constant 0 : i32
    return %c0_i32, %c0_i32_0 : i32, i32
  }
  func.func @transform_5(%arg0: i32) -> (i32, i32, i32) {
    %c0_i32 = arith.constant 0 : i32
    %c0_i32_0 = arith.constant 0 : i32
    %c0_i32_1 = arith.constant 0 : i32
    return %arg0, %c0_i32, %c0_i32_0 : i32, i32, i32
  }
  func.func @transform_6(%arg0: i32) -> (i32, i32, i32) {
    %c0_i32 = arith.constant 0 : i32
    %c0_i32_0 = arith.constant 0 : i32
    %c0_i32_1 = arith.constant 0 : i32
    return %arg0, %c0_i32, %c0_i32_0 : i32, i32, i32
  }
}

</mosaic_0001>

<llo_original>
// kernel: resnet_bottleneck_forward.2
$region0: #{resnet_bottleneck_forward.2}
  #allocation0 [shape = 'u32[]', space=smem, size = 0x4, offset = 0x4, fixed_abs, tag = 'smem constant byte address 0x4 - core index']
  #allocation1 [shape = 'u32[144,128]{1,0:T(1,128)}', space=vmem, size = 0x12000, scoped, tag = 'internal scratch']
  %s0 = inlined_call_operand.vmem [shape: bf16[128,128], index: 0, kind: input, shape index: {}]
  %s1 = inlined_call_operand.vmem [shape: bf16[128,128], index: 1, kind: input, shape index: {}]
  %s2 = inlined_call_operand.vmem [shape: f32[1,128], index: 2, kind: input, shape index: {}]
  %s3 = inlined_call_operand.vmem [shape: bf16[128,128], index: 3, kind: input, shape index: {}]
  %s4 = inlined_call_operand.vmem [shape: f32[1,128], index: 4, kind: input, shape index: {}]
  %s5 = inlined_call_operand.vmem [shape: bf16[128,128], index: 5, kind: output, shape index: {0}]
  %s6 = inlined_call_operand.vmem [shape: bf16[128,128], index: 6, kind: output, shape index: {1}]
  %7 = xla_tuple %s5, %s6
  %s8 = sld [smem:[#allocation0]]
  $region38: #{resnet_bottleneck_forward.2} parent=0
    _
  %s10 = ssub.s32 1, %s8
  %s11 = scalar_select 0, %s10, %s8
  // Predicated region
  $region2: #{resnet_bottleneck_forward.2} parent=0 // pred_check
    _
  $region3: #{resnet_bottleneck_forward.2} parent=0 // pred_check_branch
    %13 = sbr.rel (0) target = $region5
  $region4: #{resnet_bottleneck_forward.2} parent=0 // pred_region
    _
  $region5: #{resnet_bottleneck_forward.2} parent=0 // pred_fallthru
    _
  // Predicated region
  $region6: #{resnet_bottleneck_forward.2} parent=0 // pred_check
    _
  $region7: #{resnet_bottleneck_forward.2} parent=0 // pred_check_branch
    %15 = sbr.rel (0) target = $region9
  $region8: #{resnet_bottleneck_forward.2} parent=0 // pred_region
    _
  $region9: #{resnet_bottleneck_forward.2} parent=0 // pred_fallthru
    _
  // Predicated region
  $region10: #{resnet_bottleneck_forward.2} parent=0 // pred_check
    _
  $region11: #{resnet_bottleneck_forward.2} parent=0 // pred_check_branch
    %17 = sbr.rel (0) target = $region13
  $region12: #{resnet_bottleneck_forward.2} parent=0 // pred_region
    _
  $region13: #{resnet_bottleneck_forward.2} parent=0 // pred_fallthru
    _
  // Predicated region
  $region14: #{resnet_bottleneck_forward.2} parent=0 // pred_check
    _
  $region15: #{resnet_bottleneck_forward.2} parent=0 // pred_check_branch
    %19 = sbr.rel (0) target = $region17
  $region16: #{resnet_bottleneck_forward.2} parent=0 // pred_region
    _
  $region17: #{resnet_bottleneck_forward.2} parent=0 // pred_fallthru
    _
  // Predicated region
  $region18: #{resnet_bottleneck_forward.2} parent=0 // pred_check
    _
  $region19: #{resnet_bottleneck_forward.2} parent=0 // pred_check_branch
    %21 = sbr.rel (0) target = $region21
  $region20: #{resnet_bottleneck_forward.2} parent=0 // pred_region
    _
  $region21: #{resnet_bottleneck_forward.2} parent=0 // pred_fallthru
    _
  %v23 = vld [vmem:[%s0] sm:$0xf]
  %v24 = vld [vmem:[%s0 + $0x4] sm:$0xf]
  %v25 = vld [vmem:[%s0 + $0x8] sm:$0xf]
  %v26 = vld [vmem:[%s0 + $0xc] sm:$0xf]
  %v27 = vld [vmem:[%s0 + $0x10] sm:$0xf]
  %v28 = vld [vmem:[%s0 + $0x14] sm:$0xf]
  %v29 = vld [vmem:[%s0 + $0x18] sm:$0xf]
  %v30 = vld [vmem:[%s0 + $0x1c] sm:$0xf]
  %v31 = vld [vmem:[%s0 + $0x20] sm:$0xf]
  %v32 = vld [vmem:[%s0 + $0x24] sm:$0xf]
  %v33 = vld [vmem:[%s0 + $0x28] sm:$0xf]
  %v34 = vld [vmem:[%s0 + $0x2c] sm:$0xf]
  %v35 = vld [vmem:[%s0 + $0x30] sm:$0xf]
  %v36 = vld [vmem:[%s0 + $0x34] sm:$0xf]
  %v37 = vld [vmem:[%s0 + $0x38] sm:$0xf]
  %v38 = vld [vmem:[%s0 + $0x3c] sm:$0xf]
  %v39 = vld [vmem:[%s1] sm:$0xf]
  %v40 = vld [vmem:[%s1 + $0x4] sm:$0xf]
  %v41 = vld [vmem:[%s1 + $0x8] sm:$0xf]
  %v42 = vld [vmem:[%s1 + $0xc] sm:$0xf]
  %v43 = vld [vmem:[%s1 + $0x10] sm:$0xf]
  %v44 = vld [vmem:[%s1 + $0x14] sm:$0xf]
  %v45 = vld [vmem:[%s1 + $0x18] sm:$0xf]
  %v46 = vld [vmem:[%s1 + $0x1c] sm:$0xf]
  %v47 = vld [vmem:[%s1 + $0x20] sm:$0xf]
  %v48 = vld [vmem:[%s1 + $0x24] sm:$0xf]
  %v49 = vld [vmem:[%s1 + $0x28] sm:$0xf]
  %v50 = vld [vmem:[%s1 + $0x2c] sm:$0xf]
  %v51 = vld [vmem:[%s1 + $0x30] sm:$0xf]
  %v52 = vld [vmem:[%s1 + $0x34] sm:$0xf]
  %v53 = vld [vmem:[%s1 + $0x38] sm:$0xf]
  %v54 = vld [vmem:[%s1 + $0x3c] sm:$0xf]
  %v55 = vld [vmem:[%s2] sm:$0x1]
  %v57 = vlaneseq
  %v58 = vshrl.u32 %v57, 7
  %v59 = vsub.s32 0, %v58
  %v60 = vrot.slane %v55, %v59
  %v78 = vunpack.c.l.b16 %v23
  %v79 = vunpack.c.l.b16 %v24
  %v80 = vunpack.c.l.b16 %v25
  %v81 = vunpack.c.l.b16 %v26
  %v82 = vunpack.c.l.b16 %v27
  %v83 = vunpack.c.l.b16 %v28
  %v84 = vunpack.c.l.b16 %v29
  %v85 = vunpack.c.l.b16 %v30
  %v86 = vunpack.c.l.b16 %v31
  %v87 = vunpack.c.l.b16 %v32
  %v88 = vunpack.c.l.b16 %v33
  %v89 = vunpack.c.l.b16 %v34
  %v90 = vunpack.c.l.b16 %v35
  %v91 = vunpack.c.l.b16 %v36
  %v92 = vunpack.c.l.b16 %v37
  %v93 = vunpack.c.l.b16 %v38
  %v94 = vpack.c.b16 %v79, %v78
  %v95 = vpack.c.b16 %v81, %v80
  %v96 = vpack.c.b16 %v83, %v82
  %v97 = vpack.c.b16 %v85, %v84
  %v98 = vpack.c.b16 %v87, %v86
  %v99 = vpack.c.b16 %v89, %v88
  %v100 = vpack.c.b16 %v91, %v90
  %v101 = vpack.c.b16 %v93, %v92
  %v126 = vunpack.c.l.b16 %v39
  %v127 = vunpack.c.l.b16 %v40
  %v128 = vunpack.c.l.b16 %v41
  %v129 = vunpack.c.l.b16 %v42
  %v130 = vunpack.c.l.b16 %v43
  %v131 = vunpack.c.l.b16 %v44
  %v132 = vunpack.c.l.b16 %v45
  %v133 = vunpack.c.l.b16 %v46
  %v134 = vunpack.c.l.b16 %v47
  %v135 = vunpack.c.l.b16 %v48
  %v136 = vunpack.c.l.b16 %v49
  %v137 = vunpack.c.l.b16 %v50
  %v138 = vunpack.c.l.b16 %v51
  %v139 = vunpack.c.l.b16 %v52
  %v140 = vunpack.c.l.b16 %v53
  %v141 = vunpack.c.l.b16 %v54
  %v142 = vpack.c.b16 %v127, %v126
  %v143 = vpack.c.b16 %v129, %v128
  %v144 = vpack.c.b16 %v131, %v130
  %v145 = vpack.c.b16 %v133, %v132
  %v146 = vpack.c.b16 %v135, %v134
  %v147 = vpack.c.b16 %v137, %v136
  %v148 = vpack.c.b16 %v139, %v138
  %v149 = vpack.c.b16 %v141, %v140
  %158 = vmatprep.subr.bf16.mxu0 0
  %159 = vmatpush1.bf16.msra.mxu0 %v149
  %160 = vmatprep.subr.bf16.mxu0 0
  %161 = vmatpush1.bf16.msra.mxu0 %v148
  %162 = vmatprep.subr.bf16.mxu0 0
  %163 = vmatpush1.bf16.msra.mxu0 %v147
  %164 = vmatprep.subr.bf16.mxu0 0
  %165 = vmatpush1.bf16.msra.mxu0 %v146
  %166 = vmatprep.subr.bf16.mxu0 0
  %167 = vmatpush1.bf16.msra.mxu0 %v145
  %168 = vmatprep.subr.bf16.mxu0 0
  %169 = vmatpush1.bf16.msra.mxu0 %v144
  %170 = vmatprep.subr.bf16.mxu0 0
  %171 = vmatpush1.bf16.msra.mxu0 %v143
  %172 = vmatprep.subr.bf16.mxu0 0
  %173 = vmatpush1.bf16.msra.mxu0 %v142
  %174 = vmatprep.subr.bf16.mxu0 0
  %175 = vmatpush2.bf16.msra.mxu0 0
  %176 = vmatprep.subr.bf16.mxu0 0
  %177 = vmatpush2.bf16.msra.mxu0 0
  %178 = vmatprep.subr.bf16.mxu0 0
  %179 = vmatpush2.bf16.msra.mxu0 0
  %180 = vmatprep.subr.bf16.mxu0 0
  %181 = vmatpush2.bf16.msra.mxu0 0
  %182 = vmatprep.subr.bf16.mxu0 0
  %183 = vmatpush2.bf16.msra.mxu0 0
  %184 = vmatprep.subr.bf16.mxu0 0
  %185 = vmatpush2.bf16.msra.mxu0 0
  %186 = vmatprep.subr.bf16.mxu0 0
  %187 = vmatpush2.bf16.msra.mxu0 0
  %188 = vmatprep.subr.bf16.mxu0 0
  %189 = vmatpush2.bf16.msra.mxu0 0
  %190 = vmatprep.mubr.bf16.mxu0 0
  %191 = vmatmul.mubr.bf16.gmra.mxu0 %v94
  %v192 = vpop.f32.mrf.mxu0
  %v193 = vadd.f32 %v60, %v192
  %v194 = vpop.f32.mrf.mxu0
  %v195 = vpop.f32.mrf.mxu0
  %v196 = vadd.f32 %v60, %v195
  %v197 = vpop.f32.mrf.mxu0
  %198 = vmatprep.mubr.bf16.mxu0 0
  %199 = vmatmul.mubr.bf16.gmra.mxu0 %v95
  %v200 = vpop.f32.mrf.mxu0
  %v201 = vadd.f32 %v60, %v200
  %v202 = vpop.f32.mrf.mxu0
  %v203 = vpop.f32.mrf.mxu0
  %v204 = vadd.f32 %v60, %v203
  %v205 = vpop.f32.mrf.mxu0
  %206 = vmatprep.mubr.bf16.mxu0 0
  %207 = vmatmul.mubr.bf16.gmra.mxu0 %v96
  %v208 = vpop.f32.mrf.mxu0
  %v209 = vadd.f32 %v60, %v208
  %v210 = vpop.f32.mrf.mxu0
  %v211 = vpop.f32.mrf.mxu0
  %v212 = vadd.f32 %v60, %v211
  %v213 = vpop.f32.mrf.mxu0
  %214 = vmatprep.mubr.bf16.mxu0 0
  %215 = vmatmul.mubr.bf16.gmra.mxu0 %v97
  %v216 = vpop.f32.mrf.mxu0
  %v217 = vadd.f32 %v60, %v216
  %v218 = vpop.f32.mrf.mxu0
  %v219 = vpop.f32.mrf.mxu0
  %v220 = vadd.f32 %v60, %v219
  %v221 = vpop.f32.mrf.mxu0
  %222 = vmatprep.mubr.bf16.mxu0 0
  %223 = vmatmul.mubr.bf16.gmra.mxu0 %v98
  %v224 = vpop.f32.mrf.mxu0
  %v225 = vadd.f32 %v60, %v224
  %v226 = vpop.f32.mrf.mxu0
  %v227 = vpop.f32.mrf.mxu0
  %v228 = vadd.f32 %v60, %v227
  %v229 = vpop.f32.mrf.mxu0
  %230 = vmatprep.mubr.bf16.mxu0 0
  %231 = vmatmul.mubr.bf16.gmra.mxu0 %v99
  %v232 = vpop.f32.mrf.mxu0
  %v233 = vadd.f32 %v60, %v232
  %v234 = vpop.f32.mrf.mxu0
  %v235 = vpop.f32.mrf.mxu0
  %v236 = vadd.f32 %v60, %v235
  %v237 = vpop.f32.mrf.mxu0
  %238 = vmatprep.mubr.bf16.mxu0 0
  %239 = vmatmul.mubr.bf16.gmra.mxu0 %v100
  %v240 = vpop.f32.mrf.mxu0
  %v241 = vadd.f32 %v60, %v240
  %v242 = vpop.f32.mrf.mxu0
  %v243 = vpop.f32.mrf.mxu0
  %v244 = vadd.f32 %v60, %v243
  %v245 = vpop.f32.mrf.mxu0
  %246 = vmatprep.mubr.bf16.mxu0 0
  %247 = vmatmul.mubr.bf16.gmra.mxu0 %v101
  %v248 = vpop.f32.mrf.mxu0
  %v249 = vadd.f32 %v60, %v248
  %v250 = vpop.f32.mrf.mxu0
  %v251 = vpop.f32.mrf.mxu0
  %v252 = vadd.f32 %v60, %v251
  %v253 = vpop.f32.mrf.mxu0
  %254 = vdwg.mxu0
  %v255 = vmax.f32 %v193, 0.0
  %v256 = vmax.f32 %v196, 0.0
  %v257 = vmax.f32 %v201, 0.0
  %v258 = vmax.f32 %v204, 0.0
  %v259 = vmax.f32 %v209, 0.0
  %v260 = vmax.f32 %v212, 0.0
  %v261 = vmax.f32 %v217, 0.0
  %v262 = vmax.f32 %v220, 0.0
  %v263 = vmax.f32 %v225, 0.0
  %v264 = vmax.f32 %v228, 0.0
  %v265 = vmax.f32 %v233, 0.0
  %v266 = vmax.f32 %v236, 0.0
  %v267 = vmax.f32 %v241, 0.0
  %v268 = vmax.f32 %v244, 0.0
  %v269 = vmax.f32 %v249, 0.0
  %v270 = vmax.f32 %v252, 0.0
  %v271 = vpack.c.bf16 %v256, %v255
  %v272 = vpack.c.bf16 %v258, %v257
  %v273 = vpack.c.bf16 %v260, %v259
  %v274 = vpack.c.bf16 %v262, %v261
  %v275 = vpack.c.bf16 %v264, %v263
  %v276 = vpack.c.bf16 %v266, %v265
  %v277 = vpack.c.bf16 %v268, %v267
  %v278 = vpack.c.bf16 %v270, %v269
  %v287 = vunpack.c.l.b16 %v271
  %v288 = vunpack.c.h.b16 %v271
  %v289 = vunpack.c.l.b16 %v272
  %v290 = vunpack.c.h.b16 %v272
  %v291 = vunpack.c.l.b16 %v273
  %v292 = vunpack.c.h.b16 %v273
  %v293 = vunpack.c.l.b16 %v274
  %v294 = vunpack.c.h.b16 %v274
  %v295 = vunpack.c.l.b16 %v275
  %v296 = vunpack.c.h.b16 %v275
  %v297 = vunpack.c.l.b16 %v276
  %v298 = vunpack.c.h.b16 %v276
  %v299 = vunpack.c.l.b16 %v277
  %v300 = vunpack.c.h.b16 %v277
  %v301 = vunpack.c.l.b16 %v278
  %v302 = vunpack.c.h.b16 %v278
  %v303 = vpack.c.b16 %v287, %v287
  %v304 = vpack.c.b16 %v288, %v288
  %v305 = vpack.c.b16 %v289, %v289
  %v306 = vpack.c.b16 %v290, %v290
  %v307 = vpack.c.b16 %v291, %v291
  %v308 = vpack.c.b16 %v292, %v292
  %v309 = vpack.c.b16 %v293, %v293
  %v310 = vpack.c.b16 %v294, %v294
  %v311 = vpack.c.b16 %v295, %v295
  %v312 = vpack.c.b16 %v296, %v296
  %v313 = vpack.c.b16 %v297, %v297
  %v314 = vpack.c.b16 %v298, %v298
  %v315 = vpack.c.b16 %v299, %v299
  %v316 = vpack.c.b16 %v300, %v300
  %v317 = vpack.c.b16 %v301, %v301
  %v318 = vpack.c.b16 %v302, %v302
  %335 = vst [vmem:[%s5] sm:$0xf] %v303
  %336 = vst [vmem:[%s5 + $0x4] sm:$0xf] %v304
  %337 = vst [vmem:[%s5 + $0x8] sm:$0xf] %v305
  %338 = vst [vmem:[%s5 + $0xc] sm:$0xf] %v306
  %339 = vst [vmem:[%s5 + $0x10] sm:$0xf] %v307
  %340 = vst [vmem:[%s5 + $0x14] sm:$0xf] %v308
  %341 = vst [vmem:[%s5 + $0x18] sm:$0xf] %v309
  %342 = vst [vmem:[%s5 + $0x1c] sm:$0xf] %v310
  %343 = vst [vmem:[%s5 + $0x20] sm:$0xf] %v311
  %344 = vst [vmem:[%s5 + $0x24] sm:$0xf] %v312
  %345 = vst [vmem:[%s5 + $0x28] sm:$0xf] %v313
  %346 = vst [vmem:[%s5 + $0x2c] sm:$0xf] %v314
  %347 = vst [vmem:[%s5 + $0x30] sm:$0xf] %v315
  %348 = vst [vmem:[%s5 + $0x34] sm:$0xf] %v316
  %349 = vst [vmem:[%s5 + $0x38] sm:$0xf] %v317
  %350 = vst [vmem:[%s5 + $0x3c] sm:$0xf] %v318
  %v351 = vld [vmem:[%s3] sm:$0xf]
  %v352 = vld [vmem:[%s3 + $0x4] sm:$0xf]
  %v353 = vld [vmem:[%s3 + $0x8] sm:$0xf]
  %v354 = vld [vmem:[%s3 + $0xc] sm:$0xf]
  %v355 = vld [vmem:[%s3 + $0x10] sm:$0xf]
  %v356 = vld [vmem:[%s3 + $0x14] sm:$0xf]
  %v357 = vld [vmem:[%s3 + $0x18] sm:$0xf]
  %v358 = vld [vmem:[%s3 + $0x1c] sm:$0xf]
  %v359 = vld [vmem:[%s3 + $0x20] sm:$0xf]
  %v360 = vld [vmem:[%s3 + $0x24] sm:$0xf]
  %v361 = vld [vmem:[%s3 + $0x28] sm:$0xf]
  %v362 = vld [vmem:[%s3 + $0x2c] sm:$0xf]
  %v363 = vld [vmem:[%s3 + $0x30] sm:$0xf]
  %v364 = vld [vmem:[%s3 + $0x34] sm:$0xf]
  %v365 = vld [vmem:[%s3 + $0x38] sm:$0xf]
  %v366 = vld [vmem:[%s3 + $0x3c] sm:$0xf]
  %v367 = vld [vmem:[%s4] sm:$0x1]
  %v369 = vlaneseq
  %v370 = vshrl.u32 %v369, 7
  %v371 = vsub.s32 0, %v370
  %v372 = vrot.slane %v367, %v371
  %v390 = vunpack.c.l.b16 %v351
  %v391 = vunpack.c.l.b16 %v352
  %v392 = vunpack.c.l.b16 %v353
  %v393 = vunpack.c.l.b16 %v354
  %v394 = vunpack.c.l.b16 %v355
  %v395 = vunpack.c.l.b16 %v356
  %v396 = vunpack.c.l.b16 %v357
  %v397 = vunpack.c.l.b16 %v358
  %v398 = vunpack.c.l.b16 %v359
  %v399 = vunpack.c.l.b16 %v360
  %v400 = vunpack.c.l.b16 %v361
  %v401 = vunpack.c.l.b16 %v362
  %v402 = vunpack.c.l.b16 %v363
  %v403 = vunpack.c.l.b16 %v364
  %v404 = vunpack.c.l.b16 %v365
  %v405 = vunpack.c.l.b16 %v366
  %v406 = vpack.c.b16 %v391, %v390
  %v407 = vpack.c.b16 %v393, %v392
  %v408 = vpack.c.b16 %v395, %v394
  %v409 = vpack.c.b16 %v397, %v396
  %v410 = vpack.c.b16 %v399, %v398
  %v411 = vpack.c.b16 %v401, %v400
  %v412 = vpack.c.b16 %v403, %v402
  %v413 = vpack.c.b16 %v405, %v404
  %422 = vmatprep.subr.bf16.mxu0 0
  %423 = vmatpush1.bf16.msra.mxu0 %v413
  %424 = vmatprep.subr.bf16.mxu0 0
  %425 = vmatpush1.bf16.msra.mxu0 %v412
  %426 = vmatprep.subr.bf16.mxu0 0
  %427 = vmatpush1.bf16.msra.mxu0 %v411
  %428 = vmatprep.subr.bf16.mxu0 0
  %429 = vmatpush1.bf16.msra.mxu0 %v410
  %430 = vmatprep.subr.bf16.mxu0 0
  %431 = vmatpush1.bf16.msra.mxu0 %v409
  %432 = vmatprep.subr.bf16.mxu0 0
  %433 = vmatpush1.bf16.msra.mxu0 %v408
  %434 = vmatprep.subr.bf16.mxu0 0
  %435 = vmatpush1.bf16.msra.mxu0 %v407
  %436 = vmatprep.subr.bf16.mxu0 0
  %437 = vmatpush1.bf16.msra.mxu0 %v406
  %438 = vmatprep.subr.bf16.mxu0 0
  %439 = vmatpush2.bf16.msra.mxu0 0
  %440 = vmatprep.subr.bf16.mxu0 0
  %441 = vmatpush2.bf16.msra.mxu0 0
  %442 = vmatprep.subr.bf16.mxu0 0
  %443 = vmatpush2.bf16.msra.mxu0 0
  %444 = vmatprep.subr.bf16.mxu0 0
  %445 = vmatpush2.bf16.msra.mxu0 0
  %446 = vmatprep.subr.bf16.mxu0 0
  %447 = vmatpush2.bf16.msra.mxu0 0
  %448 = vmatprep.subr.bf16.mxu0 0
  %449 = vmatpush2.bf16.msra.mxu0 0
  %450 = vmatprep.subr.bf16.mxu0 0
  %451 = vmatpush2.bf16.msra.mxu0 0
  %452 = vmatprep.subr.bf16.mxu0 0
  %453 = vmatpush2.bf16.msra.mxu0 0
  %454 = vmatprep.mubr.bf16.mxu0 0
  %455 = vmatmul.mubr.bf16.gmra.mxu0 %v94
  %v456 = vpop.f32.mrf.mxu0
  %v457 = vadd.f32 %v372, %v456
  %v458 = vpop.f32.mrf.mxu0
  %v459 = vpop.f32.mrf.mxu0
  %v460 = vadd.f32 %v372, %v459
  %v461 = vpop.f32.mrf.mxu0
  %462 = vmatprep.mubr.bf16.mxu0 0
  %463 = vmatmul.mubr.bf16.gmra.mxu0 %v95
  %v464 = vpop.f32.mrf.mxu0
  %v465 = vadd.f32 %v372, %v464
  %v466 = vpop.f32.mrf.mxu0
  %v467 = vpop.f32.mrf.mxu0
  %v468 = vadd.f32 %v372, %v467
  %v469 = vpop.f32.mrf.mxu0
  %470 = vmatprep.mubr.bf16.mxu0 0
  %471 = vmatmul.mubr.bf16.gmra.mxu0 %v96
  %v472 = vpop.f32.mrf.mxu0
  %v473 = vadd.f32 %v372, %v472
  %v474 = vpop.f32.mrf.mxu0
  %v475 = vpop.f32.mrf.mxu0
  %v476 = vadd.f32 %v372, %v475
  %v477 = vpop.f32.mrf.mxu0
  %478 = vmatprep.mubr.bf16.mxu0 0
  %479 = vmatmul.mubr.bf16.gmra.mxu0 %v97
  %v480 = vpop.f32.mrf.mxu0
  %v481 = vadd.f32 %v372, %v480
  %v482 = vpop.f32.mrf.mxu0
  %v483 = vpop.f32.mrf.mxu0
  %v484 = vadd.f32 %v372, %v483
  %v485 = vpop.f32.mrf.mxu0
  %486 = vmatprep.mubr.bf16.mxu0 0
  %487 = vmatmul.mubr.bf16.gmra.mxu0 %v98
  %v488 = vpop.f32.mrf.mxu0
  %v489 = vadd.f32 %v372, %v488
  %v490 = vpop.f32.mrf.mxu0
  %v491 = vpop.f32.mrf.mxu0
  %v492 = vadd.f32 %v372, %v491
  %v493 = vpop.f32.mrf.mxu0
  %494 = vmatprep.mubr.bf16.mxu0 0
  %495 = vmatmul.mubr.bf16.gmra.mxu0 %v99
  %v496 = vpop.f32.mrf.mxu0
  %v497 = vadd.f32 %v372, %v496
  %v498 = vpop.f32.mrf.mxu0
  %v499 = vpop.f32.mrf.mxu0
  %v500 = vadd.f32 %v372, %v499
  %v501 = vpop.f32.mrf.mxu0
  %502 = vmatprep.mubr.bf16.mxu0 0
  %503 = vmatmul.mubr.bf16.gmra.mxu0 %v100
  %v504 = vpop.f32.mrf.mxu0
  %v505 = vadd.f32 %v372, %v504
  %v506 = vpop.f32.mrf.mxu0
  %v507 = vpop.f32.mrf.mxu0
  %v508 = vadd.f32 %v372, %v507
  %v509 = vpop.f32.mrf.mxu0
  %510 = vmatprep.mubr.bf16.mxu0 0
  %511 = vmatmul.mubr.bf16.gmra.mxu0 %v101
  %v512 = vpop.f32.mrf.mxu0
  %v513 = vadd.f32 %v372, %v512
  %v514 = vpop.f32.mrf.mxu0
  %v515 = vpop.f32.mrf.mxu0
  %v516 = vadd.f32 %v372, %v515
  %v517 = vpop.f32.mrf.mxu0
  %518 = vdwg.mxu0
  %v519 = vpack.c.bf16 %v460, %v457
  %v520 = vpack.c.bf16 %v468, %v465
  %v521 = vpack.c.bf16 %v476, %v473
  %v522 = vpack.c.bf16 %v484, %v481
  %v523 = vpack.c.bf16 %v492, %v489
  %v524 = vpack.c.bf16 %v500, %v497
  %v525 = vpack.c.bf16 %v508, %v505
  %v526 = vpack.c.bf16 %v516, %v513
  %v535 = vunpack.c.l.b16 %v519
  %v536 = vunpack.c.h.b16 %v519
  %v537 = vunpack.c.l.b16 %v520
  %v538 = vunpack.c.h.b16 %v520
  %v539 = vunpack.c.l.b16 %v521
  %v540 = vunpack.c.h.b16 %v521
  %v541 = vunpack.c.l.b16 %v522
  %v542 = vunpack.c.h.b16 %v522
  %v543 = vunpack.c.l.b16 %v523
  %v544 = vunpack.c.h.b16 %v523
  %v545 = vunpack.c.l.b16 %v524
  %v546 = vunpack.c.h.b16 %v524
  %v547 = vunpack.c.l.b16 %v525
  %v548 = vunpack.c.h.b16 %v525
  %v549 = vunpack.c.l.b16 %v526
  %v550 = vunpack.c.h.b16 %v526
  %v551 = vpack.c.b16 %v535, %v535
  %v552 = vpack.c.b16 %v536, %v536
  %v553 = vpack.c.b16 %v537, %v537
  %v554 = vpack.c.b16 %v538, %v538
  %v555 = vpack.c.b16 %v539, %v539
  %v556 = vpack.c.b16 %v540, %v540
  %v557 = vpack.c.b16 %v541, %v541
  %v558 = vpack.c.b16 %v542, %v542
  %v559 = vpack.c.b16 %v543, %v543
  %v560 = vpack.c.b16 %v544, %v544
  %v561 = vpack.c.b16 %v545, %v545
  %v562 = vpack.c.b16 %v546, %v546
  %v563 = vpack.c.b16 %v547, %v547
  %v564 = vpack.c.b16 %v548, %v548
  %v565 = vpack.c.b16 %v549, %v549
  %v566 = vpack.c.b16 %v550, %v550
  %583 = vst [vmem:[%s6] sm:$0xf] %v551
  %584 = vst [vmem:[%s6 + $0x4] sm:$0xf] %v552
  %585 = vst [vmem:[%s6 + $0x8] sm:$0xf] %v553
  %586 = vst [vmem:[%s6 + $0xc] sm:$0xf] %v554
  %587 = vst [vmem:[%s6 + $0x10] sm:$0xf] %v555
  %588 = vst [vmem:[%s6 + $0x14] sm:$0xf] %v556
  %589 = vst [vmem:[%s6 + $0x18] sm:$0xf] %v557
  %590 = vst [vmem:[%s6 + $0x1c] sm:$0xf] %v558
  %591 = vst [vmem:[%s6 + $0x20] sm:$0xf] %v559
  %592 = vst [vmem:[%s6 + $0x24] sm:$0xf] %v560
  %593 = vst [vmem:[%s6 + $0x28] sm:$0xf] %v561
  %594 = vst [vmem:[%s6 + $0x2c] sm:$0xf] %v562
  %595 = vst [vmem:[%s6 + $0x30] sm:$0xf] %v563
  %596 = vst [vmem:[%s6 + $0x34] sm:$0xf] %v564
  %597 = vst [vmem:[%s6 + $0x38] sm:$0xf] %v565
  %598 = vst [vmem:[%s6 + $0x3c] sm:$0xf] %v566
  // Predicated region
  $region22: #{resnet_bottleneck_forward.2} parent=0 // pred_check
    _
  $region23: #{resnet_bottleneck_forward.2} parent=0 // pred_check_branch
    %600 = sbr.rel (0) target = $region25
  $region24: #{resnet_bottleneck_forward.2} parent=0 // pred_region
    _
  $region25: #{resnet_bottleneck_forward.2} parent=0 // pred_fallthru
    _
  // Predicated region
  $region26: #{resnet_bottleneck_forward.2} parent=0 // pred_check
    _
  $region27: #{resnet_bottleneck_forward.2} parent=0 // pred_check_branch
    %602 = sbr.rel (0) target = $region29
  $region28: #{resnet_bottleneck_forward.2} parent=0 // pred_region
    _
  $region29: #{resnet_bottleneck_forward.2} parent=0 // pred_fallthru
    _
  // Predicated region
  $region30: #{resnet_bottleneck_forward.2} parent=0 // pred_check
    _
  $region31: #{resnet_bottleneck_forward.2} parent=0 // pred_check_branch
    %604 = sbr.rel (0) target = $region33
  $region32: #{resnet_bottleneck_forward.2} parent=0 // pred_region
    _
  $region33: #{resnet_bottleneck_forward.2} parent=0 // pred_fallthru
    _
  // Predicated region
  $region34: #{resnet_bottleneck_forward.2} parent=0 // pred_check
    _
  $region35: #{resnet_bottleneck_forward.2} parent=0 // pred_check_branch
    %606 = sbr.rel (0) target = $region37
  $region36: #{resnet_bottleneck_forward.2} parent=0 // pred_region
    _
  $region37: #{resnet_bottleneck_forward.2} parent=0 // pred_fallthru
    _

// kernel: resnet_bottleneck_forward.3
$region0: #{resnet_bottleneck_forward.3}
  #allocation0 [shape = 'u32[]', space=smem, size = 0x4, offset = 0x4, fixed_abs, tag = 'smem constant byte address 0x4 - core index']
  #allocation1 [shape = 'u32[144,128]{1,0:T(1,128)}', space=vmem, size = 0x12000, scoped, tag = 'internal scratch']
  %s0 = inlined_call_operand.vmem [shape: bf16[2,10,10,128], index: 0, kind: input, shape index: {}]
  %s1 = inlined_call_operand.vmem [shape: bf16[3,384,128], index: 1, kind: input, shape index: {}]
  %s2 = inlined_call_operand.vmem [shape: f32[1,128], index: 2, kind: input, shape index: {}]
  %s3 = inlined_call_operand.vmem [shape: bf16[128,128], index: 3, kind: input, shape index: {}]
  %s4 = inlined_call_operand.vmem [shape: f32[1,128], index: 4, kind: input, shape index: {}]
  %s5 = inlined_call_operand.vmem [shape: bf16[2,64,128], index: 5, kind: input, shape index: {}]
  %s6 = inlined_call_operand.vmem [shape: f32[2,64,128], index: 6, kind: output, shape index: {}]
  %s7 = sld [smem:[#allocation0]]
  $region57: #{resnet_bottleneck_forward.3} parent=0
    _
  %s9 = ssub.s32 1, %s7
  %s10 = scalar_select 0, %s9, %s7
  loop: start=0, step=1, limit=4
  $region2: #{resnet_bottleneck_forward.3} parent=0 // loop_pre_header
    _
  $region3: #{resnet_bottleneck_forward.3} parent=0 // loop_header
    %s12 = sphi 0, %s16
    %p13 = scmp.ge.s32.totalorder %s12, 4
    %s22 = sphi 0, %s24
    %s25 = sphi 0, %s22
    %s26 = sphi 0, %s25
    %s42 = sphi 0, %s26
    %s46 = sphi 0, %s46
    %s48 = sphi 0, %s46
    %s49 = sphi 0, %s48
    %s63 = sphi 0, %s49
    %s67 = sphi 0, %s67
    %s69 = sphi 0, %s67
    %s70 = sphi 0, %s69
    %s84 = sphi 0, %s70
    %s88 = sphi 0, %s88
    %s90 = sphi 0, %s88
    %s91 = sphi 0, %s90
    %s105 = sphi 0, %s91
    %s109 = sphi 0, %s109
    %s111 = sphi 0, %s109
    %s112 = sphi 0, %s111
    %s126 = sphi 0, %s112
    %s132 = sphi 0, %s134
    %s135 = sphi 0, %s132
    %s136 = sphi 0, %s135
    %s152 = sphi 0, %s136
    %s158 = sphi 0, %s160
    %s161 = sphi 0, %s158
    %s162 = sphi 0, %s161
    %s178 = sphi 0, %s162
  $region4: #{resnet_bottleneck_forward.3} parent=0 // loop_header_branch
    %15 = sbr.rel (%p13) target = $region8
  $region5: #{resnet_bottleneck_forward.3} parent=0 // loop_body
    %s17 = ssub.s32 %s12, 1
    %s18 = ssub.s32 %s12, 2
    %s19 = sadd.s32 %s12, 1
    %s20 = ssub.s32 %s12, %s19
    %p21 = scmp.eq.s32.totalorder %s20, 0
    %s23 = sadd.s32 %s22, 1
    %s24 = scalar_select %p21, %s22, %s23
    %p27 = pneg %p21
    %p28 = scmp.eq.s32.totalorder %s12, 1
    %p29 = por %p27, %p28
    %p30 = scmp.ne.s32.totalorder %s22, %s25
    %p31 = scmp.eq.s32.totalorder %s12, 0
    %p32 = por %p30, %p31
    %p33 = scmp.ne.s32.totalorder %s22, %s25
    %p34 = scmp.eq.s32.totalorder %s17, 1
    %p35 = por %p33, %p34
    %p36 = scmp.ne.s32.totalorder %s25, %s26
    %p37 = scmp.eq.s32.totalorder %s17, 0
    %p38 = por %p36, %p37
    %p39 = scmp.ne.s32.totalorder %s25, %s26
    %p40 = scmp.eq.s32.totalorder %s18, 1
    %p41 = por %p39, %p40
    %p43 = scmp.ne.s32.totalorder %s26, %s42
    %p44 = scmp.eq.s32.totalorder %s18, 0
    %p45 = por %p43, %p44
    %s47 = sadd.s32 %s46, 1
    %p50 = scmp.eq.s32.totalorder %s12, 1
    %p51 = scmp.ne.s32.totalorder %s46, %s48
    %p52 = scmp.eq.s32.totalorder %s12, 0
    %p53 = por %p51, %p52
    %p54 = scmp.ne.s32.totalorder %s46, %s48
    %p55 = scmp.eq.s32.totalorder %s17, 1
    %p56 = por %p54, %p55
    %p57 = scmp.ne.s32.totalorder %s48, %s49
    %p58 = scmp.eq.s32.totalorder %s17, 0
    %p59 = por %p57, %p58
    %p60 = scmp.ne.s32.totalorder %s48, %s49
    %p61 = scmp.eq.s32.totalorder %s18, 1
    %p62 = por %p60, %p61
    %p64 = scmp.ne.s32.totalorder %s49, %s63
    %p65 = scmp.eq.s32.totalorder %s18, 0
    %p66 = por %p64, %p65
    %s68 = sadd.s32 %s67, 1
    %p71 = scmp.eq.s32.totalorder %s12, 1
    %p72 = scmp.ne.s32.totalorder %s67, %s69
    %p73 = scmp.eq.s32.totalorder %s12, 0
    %p74 = por %p72, %p73
    %p75 = scmp.ne.s32.totalorder %s67, %s69
    %p76 = scmp.eq.s32.totalorder %s17, 1
    %p77 = por %p75, %p76
    %p78 = scmp.ne.s32.totalorder %s69, %s70
    %p79 = scmp.eq.s32.totalorder %s17, 0
    %p80 = por %p78, %p79
    %p81 = scmp.ne.s32.totalorder %s69, %s70
    %p82 = scmp.eq.s32.totalorder %s18, 1
    %p83 = por %p81, %p82
    %p85 = scmp.ne.s32.totalorder %s70, %s84
    %p86 = scmp.eq.s32.totalorder %s18, 0
    %p87 = por %p85, %p86
    %s89 = sadd.s32 %s88, 1
    %p92 = scmp.eq.s32.totalorder %s12, 1
    %p93 = scmp.ne.s32.totalorder %s88, %s90
    %p94 = scmp.eq.s32.totalorder %s12, 0
    %p95 = por %p93, %p94
    %p96 = scmp.ne.s32.totalorder %s88, %s90
    %p97 = scmp.eq.s32.totalorder %s17, 1
    %p98 = por %p96, %p97
    %p99 = scmp.ne.s32.totalorder %s90, %s91
    %p100 = scmp.eq.s32.totalorder %s17, 0
    %p101 = por %p99, %p100
    %p102 = scmp.ne.s32.totalorder %s90, %s91
    %p103 = scmp.eq.s32.totalorder %s18, 1
    %p104 = por %p102, %p103
    %p106 = scmp.ne.s32.totalorder %s91, %s105
    %p107 = scmp.eq.s32.totalorder %s18, 0
    %p108 = por %p106, %p107
    %s110 = sadd.s32 %s109, 1
    %p113 = scmp.eq.s32.totalorder %s12, 1
    %p114 = scmp.ne.s32.totalorder %s109, %s111
    %p115 = scmp.eq.s32.totalorder %s12, 0
    %p116 = por %p114, %p115
    %p117 = scmp.ne.s32.totalorder %s109, %s111
    %p118 = scmp.eq.s32.totalorder %s17, 1
    %p119 = por %p117, %p118
    %p120 = scmp.ne.s32.totalorder %s111, %s112
    %p121 = scmp.eq.s32.totalorder %s17, 0
    %p122 = por %p120, %p121
    %p123 = scmp.ne.s32.totalorder %s111, %s112
    %p124 = scmp.eq.s32.totalorder %s18, 1
    %p125 = por %p123, %p124
    %p127 = scmp.ne.s32.totalorder %s112, %s126
    %p128 = scmp.eq.s32.totalorder %s18, 0
    %p129 = por %p127, %p128
    %s130 = ssub.s32 %s12, %s19
    %p131 = scmp.eq.s32.totalorder %s130, 0
    %s133 = sadd.s32 %s132, 1
    %s134 = scalar_select %p131, %s132, %s133
    %p137 = pneg %p131
    %p138 = scmp.eq.s32.totalorder %s12, 1
    %p139 = por %p137, %p138
    %p140 = scmp.ne.s32.totalorder %s132, %s135
    %p141 = scmp.eq.s32.totalorder %s12, 0
    %p142 = por %p140, %p141
    %p143 = scmp.ne.s32.totalorder %s132, %s135
    %p144 = scmp.eq.s32.totalorder %s17, 1
    %p145 = por %p143, %p144
    %p146 = scmp.ne.s32.totalorder %s135, %s136
    %p147 = scmp.eq.s32.totalorder %s17, 0
    %p148 = por %p146, %p147
    %p149 = scmp.ne.s32.totalorder %s135, %s136
    %p150 = scmp.eq.s32.totalorder %s18, 1
    %p151 = por %p149, %p150
    %p153 = scmp.ne.s32.totalorder %s136, %s152
    %p154 = scmp.eq.s32.totalorder %s18, 0
    %p155 = por %p153, %p154
    %s156 = ssub.s32 %s12, %s19
    %p157 = scmp.eq.s32.totalorder %s156, 0
    %s159 = sadd.s32 %s158, 1
    %s160 = scalar_select %p157, %s158, %s159
    %p163 = pneg %p157
    %p164 = scmp.eq.s32.totalorder %s12, 1
    %p165 = por %p163, %p164
    %p166 = scmp.ne.s32.totalorder %s158, %s161
    %p167 = scmp.eq.s32.totalorder %s12, 0
    %p168 = por %p166, %p167
    %p169 = scmp.ne.s32.totalorder %s158, %s161
    %p170 = scmp.eq.s32.totalorder %s17, 1
    %p171 = por %p169, %p170
    %p172 = scmp.ne.s32.totalorder %s161, %s162
    %p173 = scmp.eq.s32.totalorder %s17, 0
    %p174 = por %p172, %p173
    %p175 = scmp.ne.s32.totalorder %s161, %s162
    %p176 = scmp.eq.s32.totalorder %s18, 1
    %p177 = por %p175, %p176
    %p179 = scmp.ne.s32.totalorder %s162, %s178
    %p180 = scmp.eq.s32.totalorder %s18, 0
    %p181 = por %p179, %p180
    %p182 = scmp.le.s32.totalorder 1, %s12
    %p183 = scmp.lt.s32.totalorder %s12, 3
    %p184 = pnand %p182, %p183
    %p185 = pneg %p184
    // Predicated region
    $region9: #{resnet_bottleneck_forward.3} parent=5 // pred_check
      _
    $region10: #{resnet_bottleneck_forward.3} parent=5 // pred_check_branch
      %187 = sbr.rel (%p184) target = $region12
    $region11: #{resnet_bottleneck_forward.3} parent=5 // pred_region
      %s188 = ssub.s32 %s12, 1
      // Predicated region
      $region13: #{resnet_bottleneck_forward.3} parent=11 // pred_check
        %p189 = pneg %p59
      $region14: #{resnet_bottleneck_forward.3} parent=11 // pred_check_branch
        %191 = sbr.rel (%p189) target = $region16
      $region15: #{resnet_bottleneck_forward.3} parent=11 // pred_region
        _
      $region16: #{resnet_bottleneck_forward.3} parent=11 // pred_fallthru
        _
      // Predicated region
      $region17: #{resnet_bottleneck_forward.3} parent=11 // pred_check
        %p192 = pneg %p80
      $region18: #{resnet_bottleneck_forward.3} parent=11 // pred_check_branch
        %194 = sbr.rel (%p192) target = $region20
      $region19: #{resnet_bottleneck_forward.3} parent=11 // pred_region
        _
      $region20: #{resnet_bottleneck_forward.3} parent=11 // pred_fallthru
        _
      // Predicated region
      $region21: #{resnet_bottleneck_forward.3} parent=11 // pred_check
        %p195 = pneg %p101
      $region22: #{resnet_bottleneck_forward.3} parent=11 // pred_check_branch
        %197 = sbr.rel (%p195) target = $region24
      $region23: #{resnet_bottleneck_forward.3} parent=11 // pred_region
        _
      $region24: #{resnet_bottleneck_forward.3} parent=11 // pred_fallthru
        _
      // Predicated region
      $region25: #{resnet_bottleneck_forward.3} parent=11 // pred_check
        %p198 = pneg %p122
      $region26: #{resnet_bottleneck_forward.3} parent=11 // pred_check_branch
        %200 = sbr.rel (%p198) target = $region28
      $region27: #{resnet_bottleneck_forward.3} parent=11 // pred_region
        _
      $region28: #{resnet_bottleneck_forward.3} parent=11 // pred_fallthru
        _
    $region12: #{resnet_bottleneck_forward.3} parent=5 // pred_fallthru
      _
    %p201 = scmp.lt.s32.totalorder %s12, 2
    // Predicated region
    $region29: #{resnet_bottleneck_forward.3} parent=5 // pred_check
      %p202 = pneg %p201
    $region30: #{resnet_bottleneck_forward.3} parent=5 // pred_check_branch
      %204 = sbr.rel (%p202) target = $region32
    $region31: #{resnet_bottleneck_forward.3} parent=5 // pred_region
      // Predicated region
      $region33: #{resnet_bottleneck_forward.3} parent=31 // pred_check
        %p205 = pneg %p32
      $region34: #{resnet_bottleneck_forward.3} parent=31 // pred_check_branch
        %207 = sbr.rel (%p205) target = $region36
      $region35: #{resnet_bottleneck_forward.3} parent=31 // pred_region
        %p208 = scmp.lt.s32.totalorder %s12, 1
        %s209 = scalar_select %p208, %s12, 1
        %s210 = smul.addr %s209, 20
        %s211 = smul.addr %s210, 4
        %s212 = scalar_lea.vmem %s0, %s211
      $region36: #{resnet_bottleneck_forward.3} parent=31 // pred_fallthru
        _
      // Predicated region
      $region37: #{resnet_bottleneck_forward.3} parent=31 // pred_check
        %p213 = pneg %p142
      $region38: #{resnet_bottleneck_forward.3} parent=31 // pred_check_branch
        %215 = sbr.rel (%p213) target = $region40
      $region39: #{resnet_bottleneck_forward.3} parent=31 // pred_region
        %p216 = scmp.lt.s32.totalorder %s12, 1
        %s217 = scalar_select %p216, %s12, 1
        %s218 = smul.addr %s217, 8
        %s219 = smul.addr %s218, 4
        %s220 = scalar_lea.vmem %s5, %s219
      $region40: #{resnet_bottleneck_forward.3} parent=31 // pred_fallthru
        _
    $region32: #{resnet_bottleneck_forward.3} parent=5 // pred_fallthru
      _
    %p221 = scmp.le.s32.totalorder 1, %s12
    %p222 = scmp.lt.s32.totalorder %s12, 3
    %p223 = pnand %p221, %p222
    %p224 = pneg %p223
    // Predicated region
    $region41: #{resnet_bottleneck_forward.3} parent=5 // pred_check
      _
    $region42: #{resnet_bottleneck_forward.3} parent=5 // pred_check_branch
      %226 = sbr.rel (%p223) target = $region44
    $region43: #{resnet_bottleneck_forward.3} parent=5 // pred_region
      %s227 = ssub.s32 %s12, 1
      %p228 = scmp.lt.s32.totalorder %s17, 1
      %s229 = scalar_select %p228, %s17, 1
      %s230 = smul.addr %s229, 20
      %s231 = smul.addr %s230, 4
      %s232 = scalar_lea.vmem %s0, %s231
      %p233 = pneg %p38
      %p234 = pneg %p35
      %p235 = pneg %p59
      %p236 = pneg %p56
      %p237 = pneg %p80
      %p238 = pneg %p77
      %p239 = pneg %p101
      %p240 = pneg %p98
      %p241 = pneg %p122
      %p242 = pneg %p119
      %p243 = scmp.lt.s32.totalorder %s17, 1
      %s244 = scalar_select %p243, %s17, 1
      %s245 = smul.addr %s244, 8
      %s246 = smul.addr %s245, 4
      %s247 = scalar_lea.vmem %s5, %s246
      %p248 = pneg %p148
      %p249 = pneg %p145
      %p250 = pneg %p174
      %p251 = pneg %p171
      %p252 = scmp.lt.s32.totalorder %s17, 1
      %s253 = scalar_select %p252, %s17, 1
      %s254 = smul.addr %s253, 8
      %s255 = smul.addr %s254, 8
      %s256 = scalar_lea.vmem %s6, %s255
      %p257 = scmp.lt.s32.totalorder %s17, 1
      %s258 = scalar_select %p257, %s17, 1
      %s259 = smul.addr %s258, 20
      %s260 = smul.addr %s259, 4
      %s261 = scalar_lea.vmem %s0, %s260
      %p262 = scmp.lt.s32.totalorder %s17, 1
      %s263 = scalar_select %p262, %s17, 1
      %s264 = smul.addr %s263, 8
      %s265 = smul.addr %s264, 4
      %s266 = scalar_lea.vmem %s5, %s265
      %p267 = scmp.lt.s32.totalorder %s17, 1
      %s268 = scalar_select %p267, %s17, 1
      %s269 = smul.addr %s268, 8
      %s270 = smul.addr %s269, 8
      %s271 = scalar_lea.vmem %s6, %s270
      %v273 = vld [vmem:[%s261] sm:$0xf]
      %v274 = vld [vmem:[%s261 + $0x4] sm:$0x1]
      %v275 = vld [vmem:[%s261 + $0x8] sm:$0xf]
      %v276 = vld [vmem:[%s261 + $0xc] sm:$0x1]
      %v277 = vld [vmem:[%s261 + $0x10] sm:$0xf]
      %v278 = vld [vmem:[%s261 + $0x14] sm:$0x1]
      %v279 = vld [vmem:[%s261 + $0x18] sm:$0xf]
      %v280 = vld [vmem:[%s261 + $0x1c] sm:$0x1]
      %v281 = vld [vmem:[%s261 + $0x20] sm:$0xf]
      %v282 = vld [vmem:[%s261 + $0x24] sm:$0x1]
      %v283 = vld [vmem:[%s261 + $0x28] sm:$0xf]
      %v284 = vld [vmem:[%s261 + $0x2c] sm:$0x1]
      %v285 = vld [vmem:[%s261 + $0x30] sm:$0xf]
      %v286 = vld [vmem:[%s261 + $0x34] sm:$0x1]
      %v287 = vld [vmem:[%s261 + $0x38] sm:$0xf]
      %v288 = vld [vmem:[%s261 + $0x3c] sm:$0x1]
      %v289 = vld [vmem:[%s261 + $0x40] sm:$0xf]
      %v290 = vld [vmem:[%s261 + $0x44] sm:$0x1]
      %v291 = vld [vmem:[%s261 + $0x48] sm:$0xf]
      %v292 = vld [vmem:[%s261 + $0x4c] sm:$0x1]
      %v313 = vunpack.c.l.b16 %v273
      %v314 = vunpack.c.l.b16 %v274
      %v315 = vunpack.c.l.b16 %v275
      %v316 = vunpack.c.l.b16 %v276
      %v317 = vunpack.c.l.b16 %v277
      %v318 = vunpack.c.l.b16 %v278
      %v319 = vunpack.c.l.b16 %v279
      %v320 = vunpack.c.l.b16 %v280
      %v321 = vunpack.c.l.b16 %v281
      %v322 = vunpack.c.l.b16 %v282
      %v323 = vunpack.c.l.b16 %v283
      %v324 = vunpack.c.l.b16 %v284
      %v325 = vunpack.c.l.b16 %v285
      %v326 = vunpack.c.l.b16 %v286
      %v327 = vunpack.c.l.b16 %v287
      %v328 = vunpack.c.l.b16 %v288
      %v329 = vunpack.c.l.b16 %v289
      %v330 = vunpack.c.l.b16 %v290
      %v331 = vunpack.c.l.b16 %v291
      %v332 = vunpack.c.l.b16 %v292
      %v333 = vpack.c.b16 %v314, %v313
      %v334 = vpack.c.b16 %v316, %v315
      %v335 = vpack.c.b16 %v318, %v317
      %v336 = vpack.c.b16 %v320, %v319
      %v337 = vpack.c.b16 %v322, %v321
      %v338 = vpack.c.b16 %v324, %v323
      %v339 = vpack.c.b16 %v326, %v325
      %v340 = vpack.c.b16 %v328, %v327
      %v341 = vpack.c.b16 %v330, %v329
      %v342 = vpack.c.b16 %v332, %v331
      %v344 = vshrl.u32 %v333, 16
      %v346 = vshll.u32 %v333, 16
      %v348 = vrot.slane %v346, 1
      %v349 = vor.u32 %v344, %v348
      %v351 = vshrl.u32 %v334, 16
      %v353 = vshll.u32 %v334, 16
      %v355 = vrot.slane %v353, 1
      %v356 = vor.u32 %v351, %v355
      %v358 = vshrl.u32 %v335, 16
      %v360 = vshll.u32 %v335, 16
      %v362 = vrot.slane %v360, 1
      %v363 = vor.u32 %v358, %v362
      %v365 = vshrl.u32 %v336, 16
      %v367 = vshll.u32 %v336, 16
      %v369 = vrot.slane %v367, 1
      %v370 = vor.u32 %v365, %v369
      %v372 = vshrl.u32 %v337, 16
      %v374 = vshll.u32 %v337, 16
      %v376 = vrot.slane %v374, 1
      %v377 = vor.u32 %v372, %v376
      %v379 = vshrl.u32 %v338, 16
      %v381 = vshll.u32 %v338, 16
      %v383 = vrot.slane %v381, 1
      %v384 = vor.u32 %v379, %v383
      %v386 = vshrl.u32 %v339, 16
      %v388 = vshll.u32 %v339, 16
      %v390 = vrot.slane %v388, 1
      %v391 = vor.u32 %v386, %v390
      %v393 = vshrl.u32 %v340, 16
      %v395 = vshll.u32 %v340, 16
      %v397 = vrot.slane %v395, 1
      %v398 = vor.u32 %v393, %v397
      %v400 = vshrl.u32 %v341, 16
      %v402 = vshll.u32 %v341, 16
      %v404 = vrot.slane %v402, 1
      %v405 = vor.u32 %v400, %v404
      %v407 = vshrl.u32 %v342, 16
      %v409 = vshll.u32 %v342, 16
      %v411 = vrot.slane %v409, 1
      %v412 = vor.u32 %v407, %v411
      %v413 = vrot.slane %v333, 1
      %v414 = vrot.slane %v334, 1
      %v415 = vrot.slane %v335, 1
      %v416 = vrot.slane %v336, 1
      %v417 = vrot.slane %v337, 1
      %v418 = vrot.slane %v338, 1
      %v419 = vrot.slane %v339, 1
      %v420 = vrot.slane %v340, 1
      %v421 = vrot.slane %v341, 1
      %v422 = vrot.slane %v342, 1
      %v423 = vunpack.c.l.b16 %v349
      %v424 = vunpack.c.l.b16 %v413
      %v425 = vunpack.c.l.b16 %v356
      %v426 = vunpack.c.l.b16 %v414
      %v427 = vunpack.c.l.b16 %v363
      %v428 = vunpack.c.l.b16 %v415
      %v429 = vunpack.c.l.b16 %v370
      %v430 = vunpack.c.l.b16 %v416
      %v431 = vunpack.c.l.b16 %v377
      %v432 = vunpack.c.l.b16 %v417
      %v433 = vunpack.c.l.b16 %v384
      %v434 = vunpack.c.l.b16 %v418
      %v435 = vunpack.c.l.b16 %v391
      %v436 = vunpack.c.l.b16 %v419
      %v437 = vunpack.c.l.b16 %v398
      %v438 = vunpack.c.l.b16 %v420
      %v439 = vld [vmem:[%s1] sm:$0xf]
      %v440 = vld [vmem:[%s1 + $0x4] sm:$0xf]
      %v441 = vld [vmem:[%s1 + $0x8] sm:$0xf]
      %v442 = vld [vmem:[%s1 + $0xc] sm:$0xf]
      %v443 = vld [vmem:[%s1 + $0x10] sm:$0xf]
      %v444 = vld [vmem:[%s1 + $0x14] sm:$0xf]
      %v445 = vld [vmem:[%s1 + $0x18] sm:$0xf]
      %v446 = vld [vmem:[%s1 + $0x1c] sm:$0xf]
      %v447 = vld [vmem:[%s1 + $0x20] sm:$0xf]
      %v448 = vld [vmem:[%s1 + $0x24] sm:$0xf]
      %v449 = vld [vmem:[%s1 + $0x28] sm:$0xf]
      %v450 = vld [vmem:[%s1 + $0x2c] sm:$0xf]
      %v451 = vld [vmem:[%s1 + $0x30] sm:$0xf]
      %v452 = vld [vmem:[%s1 + $0x34] sm:$0xf]
      %v453 = vld [vmem:[%s1 + $0x38] sm:$0xf]
      %v454 = vld [vmem:[%s1 + $0x3c] sm:$0xf]
      %v455 = vld [vmem:[%s1 + $0x40] sm:$0xf]
      %v456 = vld [vmem:[%s1 + $0x44] sm:$0xf]
      %v457 = vld [vmem:[%s1 + $0x48] sm:$0xf]
      %v458 = vld [vmem:[%s1 + $0x4c] sm:$0xf]
      %v459 = vld [vmem:[%s1 + $0x50] sm:$0xf]
      %v460 = vld [vmem:[%s1 + $0x54] sm:$0xf]
      %v461 = vld [vmem:[%s1 + $0x58] sm:$0xf]
      %v462 = vld [vmem:[%s1 + $0x5c] sm:$0xf]
      %v463 = vld [vmem:[%s1 + $0x60] sm:$0xf]
      %v464 = vld [vmem:[%s1 + $0x64] sm:$0xf]
      %v465 = vld [vmem:[%s1 + $0x68] sm:$0xf]
      %v466 = vld [vmem:[%s1 + $0x6c] sm:$0xf]
      %v467 = vld [vmem:[%s1 + $0x70] sm:$0xf]
      %v468 = vld [vmem:[%s1 + $0x74] sm:$0xf]
      %v469 = vld [vmem:[%s1 + $0x78] sm:$0xf]
      %v470 = vld [vmem:[%s1 + $0x7c] sm:$0xf]
      %v471 = vld [vmem:[%s1 + $0x80] sm:$0xf]
      %v472 = vld [vmem:[%s1 + $0x84] sm:$0xf]
      %v473 = vld [vmem:[%s1 + $0x88] sm:$0xf]
      %v474 = vld [vmem:[%s1 + $0x8c] sm:$0xf]
      %v475 = vld [vmem:[%s1 + $0x90] sm:$0xf]
      %v476 = vld [vmem:[%s1 + $0x94] sm:$0xf]
      %v477 = vld [vmem:[%s1 + $0x98] sm:$0xf]
      %v478 = vld [vmem:[%s1 + $0x9c] sm:$0xf]
      %v479 = vld [vmem:[%s1 + $0xa0] sm:$0xf]
      %v480 = vld [vmem:[%s1 + $0xa4] sm:$0xf]
      %v481 = vld [vmem:[%s1 + $0xa8] sm:$0xf]
      %v482 = vld [vmem:[%s1 + $0xac] sm:$0xf]
      %v483 = vld [vmem:[%s1 + $0xb0] sm:$0xf]
      %v484 = vld [vmem:[%s1 + $0xb4] sm:$0xf]
      %v485 = vld [vmem:[%s1 + $0xb8] sm:$0xf]
      %v486 = vld [vmem:[%s1 + $0xbc] sm:$0xf]
      %v487 = vunpack.c.l.b16 %v405
      %v488 = vunpack.c.l.b16 %v421
      %s489 = scalar_lea.vmem %s1, 192
      %v490 = vld [vmem:[%s489] sm:$0xf]
      %v491 = vld [vmem:[%s489 + $0x4] sm:$0xf]
      %v492 = vld [vmem:[%s489 + $0x8] sm:$0xf]
      %v493 = vld [vmem:[%s489 + $0xc] sm:$0xf]
      %v494 = vld [vmem:[%s489 + $0x10] sm:$0xf]
      %v495 = vld [vmem:[%s489 + $0x14] sm:$0xf]
      %v496 = vld [vmem:[%s489 + $0x18] sm:$0xf]
      %v497 = vld [vmem:[%s489 + $0x1c] sm:$0xf]
      %v498 = vld [vmem:[%s489 + $0x20] sm:$0xf]
      %v499 = vld [vmem:[%s489 + $0x24] sm:$0xf]
      %v500 = vld [vmem:[%s489 + $0x28] sm:$0xf]
      %v501 = vld [vmem:[%s489 + $0x2c] sm:$0xf]
      %v502 = vld [vmem:[%s489 + $0x30] sm:$0xf]
      %v503 = vld [vmem:[%s489 + $0x34] sm:$0xf]
      %v504 = vld [vmem:[%s489 + $0x38] sm:$0xf]
      %v505 = vld [vmem:[%s489 + $0x3c] sm:$0xf]
      %v506 = vld [vmem:[%s489 + $0x40] sm:$0xf]
      %v507 = vld [vmem:[%s489 + $0x44] sm:$0xf]
      %v508 = vld [vmem:[%s489 + $0x48] sm:$0xf]
      %v509 = vld [vmem:[%s489 + $0x4c] sm:$0xf]
      %v510 = vld [vmem:[%s489 + $0x50] sm:$0xf]
      %v511 = vld [vmem:[%s489 + $0x54] sm:$0xf]
      %v512 = vld [vmem:[%s489 + $0x58] sm:$0xf]
      %v513 = vld [vmem:[%s489 + $0x5c] sm:$0xf]
      %v514 = vld [vmem:[%s489 + $0x60] sm:$0xf]
      %v515 = vld [vmem:[%s489 + $0x64] sm:$0xf]
      %v516 = vld [vmem:[%s489 + $0x68] sm:$0xf]
      %v517 = vld [vmem:[%s489 + $0x6c] sm:$0xf]
      %v518 = vld [vmem:[%s489 + $0x70] sm:$0xf]
      %v519 = vld [vmem:[%s489 + $0x74] sm:$0xf]
      %v520 = vld [vmem:[%s489 + $0x78] sm:$0xf]
      %v521 = vld [vmem:[%s489 + $0x7c] sm:$0xf]
      %v522 = vld [vmem:[%s489 + $0x80] sm:$0xf]
      %v523 = vld [vmem:[%s489 + $0x84] sm:$0xf]
      %v524 = vld [vmem:[%s489 + $0x88] sm:$0xf]
      %v525 = vld [vmem:[%s489 + $0x8c] sm:$0xf]
      %v526 = vld [vmem:[%s489 + $0x90] sm:$0xf]
      %v527 = vld [vmem:[%s489 + $0x94] sm:$0xf]
      %v528 = vld [vmem:[%s489 + $0x98] sm:$0xf]
      %v529 = vld [vmem:[%s489 + $0x9c] sm:$0xf]
      %v530 = vld [vmem:[%s489 + $0xa0] sm:$0xf]
      %v531 = vld [vmem:[%s489 + $0xa4] sm:$0xf]
      %v532 = vld [vmem:[%s489 + $0xa8] sm:$0xf]
      %v533 = vld [vmem:[%s489 + $0xac] sm:$0xf]
      %v534 = vld [vmem:[%s489 + $0xb0] sm:$0xf]
      %v535 = vld [vmem:[%s489 + $0xb4] sm:$0xf]
      %v536 = vld [vmem:[%s489 + $0xb8] sm:$0xf]
      %v537 = vld [vmem:[%s489 + $0xbc] sm:$0xf]
      %v538 = vpack.c.b16 %v317, %v315
      %v539 = vpack.c.b16 %v427, %v425
      %v540 = vpack.c.b16 %v428, %v426
      %v541 = vpack.c.b16 %v321, %v319
      %v542 = vpack.c.b16 %v431, %v429
      %v543 = vpack.c.b16 %v432, %v430
      %v544 = vpack.c.b16 %v325, %v323
      %v545 = vpack.c.b16 %v435, %v433
      %v546 = vpack.c.b16 %v436, %v434
      %v547 = vpack.c.b16 %v329, %v327
      %v548 = vpack.c.b16 %v487, %v437
      %v549 = vpack.c.b16 %v488, %v438
      %v610 = vunpack.c.l.b16 %v490
      %v611 = vunpack.c.l.b16 %v491
      %v612 = vunpack.c.l.b16 %v492
      %v613 = vunpack.c.l.b16 %v493
      %v614 = vunpack.c.l.b16 %v494
      %v615 = vunpack.c.l.b16 %v495
      %v616 = vunpack.c.l.b16 %v496
      %v617 = vunpack.c.l.b16 %v497
      %v618 = vunpack.c.l.b16 %v498
      %v619 = vunpack.c.l.b16 %v499
      %v620 = vunpack.c.l.b16 %v500
      %v621 = vunpack.c.l.b16 %v501
      %v622 = vunpack.c.l.b16 %v502
      %v623 = vunpack.c.l.b16 %v503
      %v624 = vunpack.c.l.b16 %v504
      %v625 = vunpack.c.l.b16 %v505
      %v626 = vunpack.c.l.b16 %v506
      %v627 = vunpack.c.l.b16 %v507
      %v628 = vunpack.c.l.b16 %v508
      %v629 = vunpack.c.l.b16 %v509
      %v630 = vunpack.c.l.b16 %v510
      %v631 = vunpack.c.l.b16 %v511
      %v632 = vunpack.c.l.b16 %v512
      %v633 = vunpack.c.l.b16 %v513
      %v634 = vunpack.c.l.b16 %v514
      %v635 = vunpack.c.l.b16 %v515
      %v636 = vunpack.c.l.b16 %v516
      %v637 = vunpack.c.l.b16 %v517
      %v638 = vunpack.c.l.b16 %v518
      %v639 = vunpack.c.l.b16 %v519
      %v640 = vunpack.c.l.b16 %v520
      %v641 = vunpack.c.l.b16 %v521
      %v642 = vunpack.c.l.b16 %v522
      %v643 = vunpack.c.l.b16 %v523
      %v644 = vunpack.c.l.b16 %v524
      %v645 = vunpack.c.l.b16 %v525
      %v646 = vunpack.c.l.b16 %v526
      %v647 = vunpack.c.l.b16 %v527
      %v648 = vunpack.c.l.b16 %v528
      %v649 = vunpack.c.l.b16 %v529
      %v650 = vunpack.c.l.b16 %v530
      %v651 = vunpack.c.l.b16 %v531
      %v652 = vunpack.c.l.b16 %v532
      %v653 = vunpack.c.l.b16 %v533
      %v654 = vunpack.c.l.b16 %v534
      %v655 = vunpack.c.l.b16 %v535
      %v656 = vunpack.c.l.b16 %v536
      %v657 = vunpack.c.l.b16 %v537
      %v658 = vpack.c.b16 %v611, %v610
      %v659 = vpack.c.b16 %v613, %v612
      %v660 = vpack.c.b16 %v615, %v614
      %v661 = vpack.c.b16 %v617, %v616
      %v662 = vpack.c.b16 %v619, %v618
      %v663 = vpack.c.b16 %v621, %v620
      %v664 = vpack.c.b16 %v623, %v622
      %v665 = vpack.c.b16 %v625, %v624
      %v666 = vpack.c.b16 %v627, %v626
      %v667 = vpack.c.b16 %v629, %v628
      %v668 = vpack.c.b16 %v631, %v630
      %v669 = vpack.c.b16 %v633, %v632
      %v670 = vpack.c.b16 %v635, %v634
      %v671 = vpack.c.b16 %v637, %v636
      %v672 = vpack.c.b16 %v639, %v638
      %v673 = vpack.c.b16 %v641, %v640
      %v674 = vpack.c.b16 %v643, %v642
      %v675 = vpack.c.b16 %v645, %v644
      %v676 = vpack.c.b16 %v647, %v646
      %v677 = vpack.c.b16 %v649, %v648
      %v678 = vpack.c.b16 %v651, %v650
      %v679 = vpack.c.b16 %v653, %v652
      %v680 = vpack.c.b16 %v655, %v654
      %v681 = vpack.c.b16 %v657, %v656
      %706 = vmatprep.subr.bf16.mxu0 0
      %707 = vmatpush1.bf16.msra.mxu0 %v665
      %708 = vmatprep.subr.bf16.mxu0 0
      %709 = vmatpush1.bf16.msra.mxu0 %v664
      %710 = vmatprep.subr.bf16.mxu0 0
      %711 = vmatpush1.bf16.msra.mxu0 %v663
      %712 = vmatprep.subr.bf16.mxu0 0
      %713 = vmatpush1.bf16.msra.mxu0 %v662
      %714 = vmatprep.subr.bf16.mxu0 0
      %715 = vmatpush1.bf16.msra.mxu0 %v661
      %716 = vmatprep.subr.bf16.mxu0 0
      %717 = vmatpush1.bf16.msra.mxu0 %v660
      %718 = vmatprep.subr.bf16.mxu0 0
      %719 = vmatpush1.bf16.msra.mxu0 %v659
      %720 = vmatprep.subr.bf16.mxu0 0
      %721 = vmatpush1.bf16.msra.mxu0 %v658
      %722 = vmatprep.subr.bf16.mxu0 0
      %723 = vmatpush2.bf16.msra.mxu0 %v673
      %724 = vmatprep.subr.bf16.mxu0 0
      %725 = vmatpush2.bf16.msra.mxu0 %v672
      %726 = vmatprep.subr.bf16.mxu0 0
      %727 = vmatpush2.bf16.msra.mxu0 %v671
      %728 = vmatprep.subr.bf16.mxu0 0
      %729 = vmatpush2.bf16.msra.mxu0 %v670
      %730 = vmatprep.subr.bf16.mxu0 0
      %731 = vmatpush2.bf16.msra.mxu0 %v669
      %732 = vmatprep.subr.bf16.mxu0 0
      %733 = vmatpush2.bf16.msra.mxu0 %v668
      %734 = vmatprep.subr.bf16.mxu0 0
      %735 = vmatpush2.bf16.msra.mxu0 %v667
      %736 = vmatprep.subr.bf16.mxu0 0
      %737 = vmatpush2.bf16.msra.mxu0 %v666
      %738 = vmatprep.mubr.bf16.mxu0 %v539
      %739 = vmatmul.mubr.bf16.gmra.mxu0 %v538
      %v740 = vpop.f32.mrf.mxu0
      %v741 = vadd.f32 0.0, %v740
      %v742 = vpop.f32.mrf.mxu0
      %v743 = vpop.f32.mrf.mxu0
      %v744 = vadd.f32 0.0, %v743
      %v745 = vpop.f32.mrf.mxu0
      %746 = vmatprep.mubr.bf16.mxu0 %v542
      %747 = vmatmul.mubr.bf16.gmra.mxu0 %v541
      %v748 = vpop.f32.mrf.mxu0
      %v749 = vadd.f32 0.0, %v748
      %v750 = vpop.f32.mrf.mxu0
      %v751 = vpop.f32.mrf.mxu0
      %v752 = vadd.f32 0.0, %v751
      %v753 = vpop.f32.mrf.mxu0
      %754 = vmatprep.mubr.bf16.mxu0 %v545
      %755 = vmatmul.mubr.bf16.gmra.mxu0 %v544
      %v756 = vpop.f32.mrf.mxu0
      %v757 = vadd.f32 0.0, %v756
      %v758 = vpop.f32.mrf.mxu0
      %v759 = vpop.f32.mrf.mxu0
      %v760 = vadd.f32 0.0, %v759
      %v761 = vpop.f32.mrf.mxu0
      %762 = vmatprep.mubr.bf16.mxu0 %v548
      %763 = vmatmul.mubr.bf16.gmra.mxu0 %v547
      %v764 = vpop.f32.mrf.mxu0
      %v765 = vadd.f32 0.0, %v764
      %v766 = vpop.f32.mrf.mxu0
      %v767 = vpop.f32.mrf.mxu0
      %v768 = vadd.f32 0.0, %v767
      %v769 = vpop.f32.mrf.mxu0
      %770 = vdwg.mxu0
      %771 = vmatprep.subr.bf16.mxu0 0
      %772 = vmatpush1.bf16.msra.mxu0 %v681
      %773 = vmatprep.subr.bf16.mxu0 0
      %774 = vmatpush1.bf16.msra.mxu0 %v680
      %775 = vmatprep.subr.bf16.mxu0 0
      %776 = vmatpush1.bf16.msra.mxu0 %v679
      %777 = vmatprep.subr.bf16.mxu0 0
      %778 = vmatpush1.bf16.msra.mxu0 %v678
      %779 = vmatprep.subr.bf16.mxu0 0
      %780 = vmatpush1.bf16.msra.mxu0 %v677
      %781 = vmatprep.subr.bf16.mxu0 0
      %782 = vmatpush1.bf16.msra.mxu0 %v676
      %783 = vmatprep.subr.bf16.mxu0 0
      %784 = vmatpush1.bf16.msra.mxu0 %v675
      %785 = vmatprep.subr.bf16.mxu0 0
      %786 = vmatpush1.bf16.msra.mxu0 %v674
      %787 = vmatprep.subr.bf16.mxu0 0
      %788 = vmatpush2.bf16.msra.mxu0 0
      %789 = vmatprep.subr.bf16.mxu0 0
      %790 = vmatpush2.bf16.msra.mxu0 0
      %791 = vmatprep.subr.bf16.mxu0 0
      %792 = vmatpush2.bf16.msra.mxu0 0
      %793 = vmatprep.subr.bf16.mxu0 0
      %794 = vmatpush2.bf16.msra.mxu0 0
      %795 = vmatprep.subr.bf16.mxu0 0
      %796 = vmatpush2.bf16.msra.mxu0 0
      %797 = vmatprep.subr.bf16.mxu0 0
      %798 = vmatpush2.bf16.msra.mxu0 0
      %799 = vmatprep.subr.bf16.mxu0 0
      %800 = vmatpush2.bf16.msra.mxu0 0
      %801 = vmatprep.subr.bf16.mxu0 0
      %802 = vmatpush2.bf16.msra.mxu0 0
      %803 = vmatprep.mubr.bf16.mxu0 0
      %804 = vmatmul.mubr.bf16.gmra.mxu0 %v540
      %v805 = vpop.f32.mrf.mxu0
      %v806 = vadd.f32 %v741, %v805
      %v807 = vpop.f32.mrf.mxu0
      %v808 = vpop.f32.mrf.mxu0
      %v809 = vadd.f32 %v744, %v808
      %v810 = vpop.f32.mrf.mxu0
      %811 = vmatprep.mubr.bf16.mxu0 0
      %812 = vmatmul.mubr.bf16.gmra.mxu0 %v543
      %v813 = vpop.f32.mrf.mxu0
      %v814 = vadd.f32 %v749, %v813
      %v815 = vpop.f32.mrf.mxu0
      %v816 = vpop.f32.mrf.mxu0
      %v817 = vadd.f32 %v752, %v816
      %v818 = vpop.f32.mrf.mxu0
      %819 = vmatprep.mubr.bf16.mxu0 0
      %820 = vmatmul.mubr.bf16.gmra.mxu0 %v546
      %v821 = vpop.f32.mrf.mxu0
      %v822 = vadd.f32 %v757, %v821
      %v823 = vpop.f32.mrf.mxu0
      %v824 = vpop.f32.mrf.mxu0
      %v825 = vadd.f32 %v760, %v824
      %v826 = vpop.f32.mrf.mxu0
      %827 = vmatprep.mubr.bf16.mxu0 0
      %828 = vmatmul.mubr.bf16.gmra.mxu0 %v549
      %v829 = vpop.f32.mrf.mxu0
      %v830 = vadd.f32 %v765, %v829
      %v831 = vpop.f32.mrf.mxu0
      %v832 = vpop.f32.mrf.mxu0
      %v833 = vadd.f32 %v768, %v832
      %v834 = vpop.f32.mrf.mxu0
      %835 = vdwg.mxu0
      %v836 = vpack.c.b16 %v315, %v313
      %v837 = vpack.c.b16 %v425, %v423
      %v838 = vpack.c.b16 %v426, %v424
      %v839 = vpack.c.b16 %v319, %v317
      %v840 = vpack.c.b16 %v429, %v427
      %v841 = vpack.c.b16 %v430, %v428
      %v842 = vpack.c.b16 %v323, %v321
      %v843 = vpack.c.b16 %v433, %v431
      %v844 = vpack.c.b16 %v434, %v432
      %v845 = vpack.c.b16 %v327, %v325
      %v846 = vpack.c.b16 %v437, %v435
      %v847 = vpack.c.b16 %v438, %v436
      %v908 = vunpack.c.l.b16 %v439
      %v909 = vunpack.c.l.b16 %v440
      %v910 = vunpack.c.l.b16 %v441
      %v911 = vunpack.c.l.b16 %v442
      %v912 = vunpack.c.l.b16 %v443
      %v913 = vunpack.c.l.b16 %v444
      %v914 = vunpack.c.l.b16 %v445
      %v915 = vunpack.c.l.b16 %v446
      %v916 = vunpack.c.l.b16 %v447
      %v917 = vunpack.c.l.b16 %v448
      %v918 = vunpack.c.l.b16 %v449
      %v919 = vunpack.c.l.b16 %v450
      %v920 = vunpack.c.l.b16 %v451
      %v921 = vunpack.c.l.b16 %v452
      %v922 = vunpack.c.l.b16 %v453
      %v923 = vunpack.c.l.b16 %v454
      %v924 = vunpack.c.l.b16 %v455
      %v925 = vunpack.c.l.b16 %v456
      %v926 = vunpack.c.l.b16 %v457
      %v927 = vunpack.c.l.b16 %v458
      %v928 = vunpack.c.l.b16 %v459
      %v929 = vunpack.c.l.b16 %v460
      %v930 = vunpack.c.l.b16 %v461
      %v931 = vunpack.c.l.b16 %v462
      %v932 = vunpack.c.l.b16 %v463
      %v933 = vunpack.c.l.b16 %v464
      %v934 = vunpack.c.l.b16 %v465
      %v935 = vunpack.c.l.b16 %v466
      %v936 = vunpack.c.l.b16 %v467
      %v937 = vunpack.c.l.b16 %v468
      %v938 = vunpack.c.l.b16 %v469
      %v939 = vunpack.c.l.b16 %v470
      %v940 = vunpack.c.l.b16 %v471
      %v941 = vunpack.c.l.b16 %v472
      %v942 = vunpack.c.l.b16 %v473
      %v943 = vunpack.c.l.b16 %v474
      %v944 = vunpack.c.l.b16 %v475
      %v945 = vunpack.c.l.b16 %v476
      %v946 = vunpack.c.l.b16 %v477
      %v947 = vunpack.c.l.b16 %v478
      %v948 = vunpack.c.l.b16 %v479
      %v949 = vunpack.c.l.b16 %v480
      %v950 = vunpack.c.l.b16 %v481
      %v951 = vunpack.c.l.b16 %v482
      %v952 = vunpack.c.l.b16 %v483
      %v953 = vunpack.c.l.b16 %v484
      %v954 = vunpack.c.l.b16 %v485
      %v955 = vunpack.c.l.b16 %v486
      %v956 = vpack.c.b16 %v909, %v908
      %v957 = vpack.c.b16 %v911, %v910
      %v958 = vpack.c.b16 %v913, %v912
      %v959 = vpack.c.b16 %v915, %v914
      %v960 = vpack.c.b16 %v917, %v916
      %v961 = vpack.c.b16 %v919, %v918
      %v962 = vpack.c.b16 %v921, %v920
      %v963 = vpack.c.b16 %v923, %v922
      %v964 = vpack.c.b16 %v925, %v924
      %v965 = vpack.c.b16 %v927, %v926
      %v966 = vpack.c.b16 %v929, %v928
      %v967 = vpack.c.b16 %v931, %v930
      %v968 = vpack.c.b16 %v933, %v932
      %v969 = vpack.c.b16 %v935, %v934
      %v970 = vpack.c.b16 %v937, %v936
      %v971 = vpack.c.b16 %v939, %v938
      %v972 = vpack.c.b16 %v941, %v940
      %v973 = vpack.c.b16 %v943, %v942
      %v974 = vpack.c.b16 %v945, %v944
      %v975 = vpack.c.b16 %v947, %v946
      %v976 = vpack.c.b16 %v949, %v948
      %v977 = vpack.c.b16 %v951, %v950
      %v978 = vpack.c.b16 %v953, %v952
      %v979 = vpack.c.b16 %v955, %v954
      %1004 = vmatprep.subr.bf16.mxu0 0
      %1005 = vmatpush1.bf16.msra.mxu0 %v963
      %1006 = vmatprep.subr.bf16.mxu0 0
      %1007 = vmatpush1.bf16.msra.mxu0 %v962
      %1008 = vmatprep.subr.bf16.mxu0 0
      %1009 = vmatpush1.bf16.msra.mxu0 %v961
      %1010 = vmatprep.subr.bf16.mxu0 0
      %1011 = vmatpush1.bf16.msra.mxu0 %v960
      %1012 = vmatprep.subr.bf16.mxu0 0
      %1013 = vmatpush1.bf16.msra.mxu0 %v959
      %1014 = vmatprep.subr.bf16.mxu0 0
      %1015 = vmatpush1.bf16.msra.mxu0 %v958
      %1016 = vmatprep.subr.bf16.mxu0 0
      %1017 = vmatpush1.bf16.msra.mxu0 %v957
      %1018 = vmatprep.subr.bf16.mxu0 0
      %1019 = vmatpush1.bf16.msra.mxu0 %v956
      %1020 = vmatprep.subr.bf16.mxu0 0
      %1021 = vmatpush2.bf16.msra.mxu0 %v971
      %1022 = vmatprep.subr.bf16.mxu0 0
      %1023 = vmatpush2.bf16.msra.mxu0 %v970
      %1024 = vmatprep.subr.bf16.mxu0 0
      %1025 = vmatpush2.bf16.msra.mxu0 %v969
      %1026 = vmatprep.subr.bf16.mxu0 0
      %1027 = vmatpush2.bf16.msra.mxu0 %v968
      %1028 = vmatprep.subr.bf16.mxu0 0
      %1029 = vmatpush2.bf16.msra.mxu0 %v967
      %1030 = vmatprep.subr.bf16.mxu0 0
      %1031 = vmatpush2.bf16.msra.mxu0 %v966
      %1032 = vmatprep.subr.bf16.mxu0 0
      %1033 = vmatpush2.bf16.msra.mxu0 %v965
      %1034 = vmatprep.subr.bf16.mxu0 0
      %1035 = vmatpush2.bf16.msra.mxu0 %v964
      %1036 = vmatprep.mubr.bf16.mxu0 %v837
      %1037 = vmatmul.mubr.bf16.gmra.mxu0 %v836
      %v1038 = vpop.f32.mrf.mxu0
      %v1039 = vadd.f32 %v806, %v1038
      %v1040 = vpop.f32.mrf.mxu0
      %v1041 = vpop.f32.mrf.mxu0
      %v1042 = vadd.f32 %v809, %v1041
      %v1043 = vpop.f32.mrf.mxu0
      %1044 = vmatprep.mubr.bf16.mxu0 %v840
      %1045 = vmatmul.mubr.bf16.gmra.mxu0 %v839
      %v1046 = vpop.f32.mrf.mxu0
      %v1047 = vadd.f32 %v814, %v1046
      %v1048 = vpop.f32.mrf.mxu0
      %v1049 = vpop.f32.mrf.mxu0
      %v1050 = vadd.f32 %v817, %v1049
      %v1051 = vpop.f32.mrf.mxu0
      %1052 = vmatprep.mubr.bf16.mxu0 %v843
      %1053 = vmatmul.mubr.bf16.gmra.mxu0 %v842
      %v1054 = vpop.f32.mrf.mxu0
      %v1055 = vadd.f32 %v822, %v1054
      %v1056 = vpop.f32.mrf.mxu0
      %v1057 = vpop.f32.mrf.mxu0
      %v1058 = vadd.f32 %v825, %v1057
      %v1059 = vpop.f32.mrf.mxu0
      %1060 = vmatprep.mubr.bf16.mxu0 %v846
      %1061 = vmatmul.mubr.bf16.gmra.mxu0 %v845
      %v1062 = vpop.f32.mrf.mxu0
      %v1063 = vadd.f32 %v830, %v1062
      %v1064 = vpop.f32.mrf.mxu0
      %v1065 = vpop.f32.mrf.mxu0
      %v1066 = vadd.f32 %v833, %v1065
      %v1067 = vpop.f32.mrf.mxu0
      %1068 = vdwg.mxu0
      %1069 = vmatprep.subr.bf16.mxu0 0
      %1070 = vmatpush1.bf16.msra.mxu0 %v979
      %1071 = vmatprep.subr.bf16.mxu0 0
      %1072 = vmatpush1.bf16.msra.mxu0 %v978
      %1073 = vmatprep.subr.bf16.mxu0 0
      %1074 = vmatpush1.bf16.msra.mxu0 %v977
      %1075 = vmatprep.subr.bf16.mxu0 0
      %1076 = vmatpush1.bf16.msra.mxu0 %v976
      %1077 = vmatprep.subr.bf16.mxu0 0
      %1078 = vmatpush1.bf16.msra.mxu0 %v975
      %1079 = vmatprep.subr.bf16.mxu0 0
      %1080 = vmatpush1.bf16.msra.mxu0 %v974
      %1081 = vmatprep.subr.bf16.mxu0 0
      %1082 = vmatpush1.bf16.msra.mxu0 %v973
      %1083 = vmatprep.subr.bf16.mxu0 0
      %1084 = vmatpush1.bf16.msra.mxu0 %v972
      %1085 = vmatprep.subr.bf16.mxu0 0
      %1086 = vmatpush2.bf16.msra.mxu0 0
      %1087 = vmatprep.subr.bf16.mxu0 0
      %1088 = vmatpush2.bf16.msra.mxu0 0
      %1089 = vmatprep.subr.bf16.mxu0 0
      %1090 = vmatpush2.bf16.msra.mxu0 0
      %1091 = vmatprep.subr.bf16.mxu0 0
      %1092 = vmatpush2.bf16.msra.mxu0 0
      %1093 = vmatprep.subr.bf16.mxu0 0
      %1094 = vmatpush2.bf16.msra.mxu0 0
      %1095 = vmatprep.subr.bf16.mxu0 0
      %1096 = vmatpush2.bf16.msra.mxu0 0
      %1097 = vmatprep.subr.bf16.mxu0 0
      %1098 = vmatpush2.bf16.msra.mxu0 0
      %1099 = vmatprep.subr.bf16.mxu0 0
      %1100 = vmatpush2.bf16.msra.mxu0 0
      %1101 = vmatprep.mubr.bf16.mxu0 0
      %1102 = vmatmul.mubr.bf16.gmra.mxu0 %v838
      %v1103 = vpop.f32.mrf.mxu0
      %v1104 = vadd.f32 %v1039, %v1103
      %v1105 = vpop.f32.mrf.mxu0
      %v1106 = vpop.f32.mrf.mxu0
      %v1107 = vadd.f32 %v1042, %v1106
      %v1108 = vpop.f32.mrf.mxu0
      %1109 = vmatprep.mubr.bf16.mxu0 0
      %1110 = vmatmul.mubr.bf16.gmra.mxu0 %v841
      %v1111 = vpop.f32.mrf.mxu0
      %v1112 = vadd.f32 %v1047, %v1111
      %v1113 = vpop.f32.mrf.mxu0
      %v1114 = vpop.f32.mrf.mxu0
      %v1115 = vadd.f32 %v1050, %v1114
      %v1116 = vpop.f32.mrf.mxu0
      %1117 = vmatprep.mubr.bf16.mxu0 0
      %1118 = vmatmul.mubr.bf16.gmra.mxu0 %v844
      %v1119 = vpop.f32.mrf.mxu0
      %v1120 = vadd.f32 %v1055, %v1119
      %v1121 = vpop.f32.mrf.mxu0
      %v1122 = vpop.f32.mrf.mxu0
      %v1123 = vadd.f32 %v1058, %v1122
      %v1124 = vpop.f32.mrf.mxu0
      %1125 = vmatprep.mubr.bf16.mxu0 0
      %1126 = vmatmul.mubr.bf16.gmra.mxu0 %v847
      %v1127 = vpop.f32.mrf.mxu0
      %v1128 = vadd.f32 %v1063, %v1127
      %v1129 = vpop.f32.mrf.mxu0
      %v1130 = vpop.f32.mrf.mxu0
      %v1131 = vadd.f32 %v1066, %v1130
      %v1132 = vpop.f32.mrf.mxu0
      %1133 = vdwg.mxu0
      %v1134 = vunpack.c.l.b16 %v412
      %v1135 = vunpack.c.l.b16 %v422
      %s1136 = scalar_lea.vmem %s1, 384
      %v1137 = vld [vmem:[%s1136] sm:$0xf]
      %v1138 = vld [vmem:[%s1136 + $0x4] sm:$0xf]
      %v1139 = vld [vmem:[%s1136 + $0x8] sm:$0xf]
      %v1140 = vld [vmem:[%s1136 + $0xc] sm:$0xf]
      %v1141 = vld [vmem:[%s1136 + $0x10] sm:$0xf]
      %v1142 = vld [vmem:[%s1136 + $0x14] sm:$0xf]
      %v1143 = vld [vmem:[%s1136 + $0x18] sm:$0xf]
      %v1144 = vld [vmem:[%s1136 + $0x1c] sm:$0xf]
      %v1145 = vld [vmem:[%s1136 + $0x20] sm:$0xf]
      %v1146 = vld [vmem:[%s1136 + $0x24] sm:$0xf]
      %v1147 = vld [vmem:[%s1136 + $0x28] sm:$0xf]
      %v1148 = vld [vmem:[%s1136 + $0x2c] sm:$0xf]
      %v1149 = vld [vmem:[%s1136 + $0x30] sm:$0xf]
      %v1150 = vld [vmem:[%s1136 + $0x34] sm:$0xf]
      %v1151 = vld [vmem:[%s1136 + $0x38] sm:$0xf]
      %v1152 = vld [vmem:[%s1136 + $0x3c] sm:$0xf]
      %v1153 = vld [vmem:[%s1136 + $0x40] sm:$0xf]
      %v1154 = vld [vmem:[%s1136 + $0x44] sm:$0xf]
      %v1155 = vld [vmem:[%s1136 + $0x48] sm:$0xf]
      %v1156 = vld [vmem:[%s1136 + $0x4c] sm:$0xf]
      %v1157 = vld [vmem:[%s1136 + $0x50] sm:$0xf]
      %v1158 = vld [vmem:[%s1136 + $0x54] sm:$0xf]
      %v1159 = vld [vmem:[%s1136 + $0x58] sm:$0xf]
      %v1160 = vld [vmem:[%s1136 + $0x5c] sm:$0xf]
      %v1161 = vld [vmem:[%s1136 + $0x60] sm:$0xf]
      %v1162 = vld [vmem:[%s1136 + $0x64] sm:$0xf]
      %v1163 = vld [vmem:[%s1136 + $0x68] sm:$0xf]
      %v1164 = vld [vmem:[%s1136 + $0x6c] sm:$0xf]
      %v1165 = vld [vmem:[%s1136 + $0x70] sm:$0xf]
      %v1166 = vld [vmem:[%s1136 + $0x74] sm:$0xf]
      %v1167 = vld [vmem:[%s1136 + $0x78] sm:$0xf]
      %v1168 = vld [vmem:[%s1136 + $0x7c] sm:$0xf]
      %v1169 = vld [vmem:[%s1136 + $0x80] sm:$0xf]
      %v1170 = vld [vmem:[%s1136 + $0x84] sm:$0xf]
      %v1171 = vld [vmem:[%s1136 + $0x88] sm:$0xf]
      %v1172 = vld [vmem:[%s1136 + $0x8c] sm:$0xf]
      %v1173 = vld [vmem:[%s1136 + $0x90] sm:$0xf]
      %v1174 = vld [vmem:[%s1136 + $0x94] sm:$0xf]
      %v1175 = vld [vmem:[%s1136 + $0x98] sm:$0xf]
      %v1176 = vld [vmem:[%s1136 + $0x9c] sm:$0xf]
      %v1177 = vld [vmem:[%s1136 + $0xa0] sm:$0xf]
      %v1178 = vld [vmem:[%s1136 + $0xa4] sm:$0xf]
      %v1179 = vld [vmem:[%s1136 + $0xa8] sm:$0xf]
      %v1180 = vld [vmem:[%s1136 + $0xac] sm:$0xf]
      %v1181 = vld [vmem:[%s1136 + $0xb0] sm:$0xf]
      %v1182 = vld [vmem:[%s1136 + $0xb4] sm:$0xf]
      %v1183 = vld [vmem:[%s1136 + $0xb8] sm:$0xf]
      %v1184 = vld [vmem:[%s1136 + $0xbc] sm:$0xf]
      %v1185 = vpack.c.b16 %v331, %v329
      %v1186 = vpack.c.b16 %v1134, %v487
      %v1187 = vpack.c.b16 %v1135, %v488
      %v1239 = vunpack.c.l.b16 %v1137
      %v1240 = vunpack.c.l.b16 %v1138
      %v1241 = vunpack.c.l.b16 %v1139
      %v1242 = vunpack.c.l.b16 %v1140
      %v1243 = vunpack.c.l.b16 %v1141
      %v1244 = vunpack.c.l.b16 %v1142
      %v1245 = vunpack.c.l.b16 %v1143
      %v1246 = vunpack.c.l.b16 %v1144
      %v1247 = vunpack.c.l.b16 %v1145
      %v1248 = vunpack.c.l.b16 %v1146
      %v1249 = vunpack.c.l.b16 %v1147
      %v1250 = vunpack.c.l.b16 %v1148
      %v1251 = vunpack.c.l.b16 %v1149
      %v1252 = vunpack.c.l.b16 %v1150
      %v1253 = vunpack.c.l.b16 %v1151
      %v1254 = vunpack.c.l.b16 %v1152
      %v1255 = vunpack.c.l.b16 %v1153
      %v1256 = vunpack.c.l.b16 %v1154
      %v1257 = vunpack.c.l.b16 %v1155
      %v1258 = vunpack.c.l.b16 %v1156
      %v1259 = vunpack.c.l.b16 %v1157
      %v1260 = vunpack.c.l.b16 %v1158
      %v1261 = vunpack.c.l.b16 %v1159
      %v1262 = vunpack.c.l.b16 %v1160
      %v1263 = vunpack.c.l.b16 %v1161
      %v1264 = vunpack.c.l.b16 %v1162
      %v1265 = vunpack.c.l.b16 %v1163
      %v1266 = vunpack.c.l.b16 %v1164
      %v1267 = vunpack.c.l.b16 %v1165
      %v1268 = vunpack.c.l.b16 %v1166
      %v1269 = vunpack.c.l.b16 %v1167
      %v1270 = vunpack.c.l.b16 %v1168
      %v1271 = vunpack.c.l.b16 %v1169
      %v1272 = vunpack.c.l.b16 %v1170
      %v1273 = vunpack.c.l.b16 %v1171
      %v1274 = vunpack.c.l.b16 %v1172
      %v1275 = vunpack.c.l.b16 %v1173
      %v1276 = vunpack.c.l.b16 %v1174
      %v1277 = vunpack.c.l.b16 %v1175
      %v1278 = vunpack.c.l.b16 %v1176
      %v1279 = vunpack.c.l.b16 %v1177
      %v1280 = vunpack.c.l.b16 %v1178
      %v1281 = vunpack.c.l.b16 %v1179
      %v1282 = vunpack.c.l.b16 %v1180
      %v1283 = vunpack.c.l.b16 %v1181
      %v1284 = vunpack.c.l.b16 %v1182
      %v1285 = vunpack.c.l.b16 %v1183
      %v1286 = vunpack.c.l.b16 %v1184
      %v1287 = vpack.c.b16 %v1240, %v1239
      %v1288 = vpack.c.b16 %v1242, %v1241
      %v1289 = vpack.c.b16 %v1244, %v1243
      %v1290 = vpack.c.b16 %v1246, %v1245
      %v1291 = vpack.c.b16 %v1248, %v1247
      %v1292 = vpack.c.b16 %v1250, %v1249
      %v1293 = vpack.c.b16 %v1252, %v1251
      %v1294 = vpack.c.b16 %v1254, %v1253
      %v1295 = vpack.c.b16 %v1256, %v1255
      %v1296 = vpack.c.b16 %v1258, %v1257
      %v1297 = vpack.c.b16 %v1260, %v1259
      %v1298 = vpack.c.b16 %v1262, %v1261
      %v1299 = vpack.c.b16 %v1264, %v1263
      %v1300 = vpack.c.b16 %v1266, %v1265
      %v1301 = vpack.c.b16 %v1268, %v1267
      %v1302 = vpack.c.b16 %v1270, %v1269
      %v1303 = vpack.c.b16 %v1272, %v1271
      %v1304 = vpack.c.b16 %v1274, %v1273
      %v1305 = vpack.c.b16 %v1276, %v1275
      %v1306 = vpack.c.b16 %v1278, %v1277
      %v1307 = vpack.c.b16 %v1280, %v1279
      %v1308 = vpack.c.b16 %v1282, %v1281
      %v1309 = vpack.c.b16 %v1284, %v1283
      %v1310 = vpack.c.b16 %v1286, %v1285
      %1335 = vmatprep.subr.bf16.mxu0 0
      %1336 = vmatpush1.bf16.msra.mxu0 %v1294
      %1337 = vmatprep.subr.bf16.mxu0 0
      %1338 = vmatpush1.bf16.msra.mxu0 %v1293
      %1339 = vmatprep.subr.bf16.mxu0 0
      %1340 = vmatpush1.bf16.msra.mxu0 %v1292
      %1341 = vmatprep.subr.bf16.mxu0 0
      %1342 = vmatpush1.bf16.msra.mxu0 %v1291
      %1343 = vmatprep.subr.bf16.mxu0 0
      %1344 = vmatpush1.bf16.msra.mxu0 %v1290
      %1345 = vmatprep.subr.bf16.mxu0 0
      %1346 = vmatpush1.bf16.msra.mxu0 %v1289
      %1347 = vmatprep.subr.bf16.mxu0 0
      %1348 = vmatpush1.bf16.msra.mxu0 %v1288
      %1349 = vmatprep.subr.bf16.mxu0 0
      %1350 = vmatpush1.bf16.msra.mxu0 %v1287
      %1351 = vmatprep.subr.bf16.mxu0 0
      %1352 = vmatpush2.bf16.msra.mxu0 %v1302
      %1353 = vmatprep.subr.bf16.mxu0 0
      %1354 = vmatpush2.bf16.msra.mxu0 %v1301
      %1355 = vmatprep.subr.bf16.mxu0 0
      %1356 = vmatpush2.bf16.msra.mxu0 %v1300
      %1357 = vmatprep.subr.bf16.mxu0 0
      %1358 = vmatpush2.bf16.msra.mxu0 %v1299
      %1359 = vmatprep.subr.bf16.mxu0 0
      %1360 = vmatpush2.bf16.msra.mxu0 %v1298
      %1361 = vmatprep.subr.bf16.mxu0 0
      %1362 = vmatpush2.bf16.msra.mxu0 %v1297
      %1363 = vmatprep.subr.bf16.mxu0 0
      %1364 = vmatpush2.bf16.msra.mxu0 %v1296
      %1365 = vmatprep.subr.bf16.mxu0 0
      %1366 = vmatpush2.bf16.msra.mxu0 %v1295
      %1367 = vmatprep.mubr.bf16.mxu0 %v840
      %1368 = vmatmul.mubr.bf16.gmra.mxu0 %v839
      %v1369 = vpop.f32.mrf.mxu0
      %v1370 = vadd.f32 0.0, %v1369
      %v1371 = vpop.f32.mrf.mxu0
      %v1372 = vpop.f32.mrf.mxu0
      %v1373 = vadd.f32 0.0, %v1372
      %v1374 = vpop.f32.mrf.mxu0
      %1375 = vmatprep.mubr.bf16.mxu0 %v843
      %1376 = vmatmul.mubr.bf16.gmra.mxu0 %v842
      %v1377 = vpop.f32.mrf.mxu0
      %v1378 = vadd.f32 0.0, %v1377
      %v1379 = vpop.f32.mrf.mxu0
      %v1380 = vpop.f32.mrf.mxu0
      %v1381 = vadd.f32 0.0, %v1380
      %v1382 = vpop.f32.mrf.mxu0
      %1383 = vmatprep.mubr.bf16.mxu0 %v846
      %1384 = vmatmul.mubr.bf16.gmra.mxu0 %v845
      %v1385 = vpop.f32.mrf.mxu0
      %v1386 = vadd.f32 0.0, %v1385
      %v1387 = vpop.f32.mrf.mxu0
      %v1388 = vpop.f32.mrf.mxu0
      %v1389 = vadd.f32 0.0, %v1388
      %v1390 = vpop.f32.mrf.mxu0
      %1391 = vmatprep.mubr.bf16.mxu0 %v1186
      %1392 = vmatmul.mubr.bf16.gmra.mxu0 %v1185
      %v1393 = vpop.f32.mrf.mxu0
      %v1394 = vadd.f32 0.0, %v1393
      %v1395 = vpop.f32.mrf.mxu0
      %v1396 = vpop.f32.mrf.mxu0
      %v1397 = vadd.f32 0.0, %v1396
      %v1398 = vpop.f32.mrf.mxu0
      %1399 = vdwg.mxu0
      %1400 = vmatprep.subr.bf16.mxu0 0
      %1401 = vmatpush1.bf16.msra.mxu0 %v1310
      %1402 = vmatprep.subr.bf16.mxu0 0
      %1403 = vmatpush1.bf16.msra.mxu0 %v1309
      %1404 = vmatprep.subr.bf16.mxu0 0
      %1405 = vmatpush1.bf16.msra.mxu0 %v1308
      %1406 = vmatprep.subr.bf16.mxu0 0
      %1407 = vmatpush1.bf16.msra.mxu0 %v1307
      %1408 = vmatprep.subr.bf16.mxu0 0
      %1409 = vmatpush1.bf16.msra.mxu0 %v1306
      %1410 = vmatprep.subr.bf16.mxu0 0
      %1411 = vmatpush1.bf16.msra.mxu0 %v1305
      %1412 = vmatprep.subr.bf16.mxu0 0
      %1413 = vmatpush1.bf16.msra.mxu0 %v1304
      %1414 = vmatprep.subr.bf16.mxu0 0
      %1415 = vmatpush1.bf16.msra.mxu0 %v1303
      %1416 = vmatprep.subr.bf16.mxu0 0
      %1417 = vmatpush2.bf16.msra.mxu0 0
      %1418 = vmatprep.subr.bf16.mxu0 0
      %1419 = vmatpush2.bf16.msra.mxu0 0
      %1420 = vmatprep.subr.bf16.mxu0 0
      %1421 = vmatpush2.bf16.msra.mxu0 0
      %1422 = vmatprep.subr.bf16.mxu0 0
      %1423 = vmatpush2.bf16.msra.mxu0 0
      %1424 = vmatprep.subr.bf16.mxu0 0
      %1425 = vmatpush2.bf16.msra.mxu0 0
      %1426 = vmatprep.subr.bf16.mxu0 0
      %1427 = vmatpush2.bf16.msra.mxu0 0
      %1428 = vmatprep.subr.bf16.mxu0 0
      %1429 = vmatpush2.bf16.msra.mxu0 0
      %1430 = vmatprep.subr.bf16.mxu0 0
      %1431 = vmatpush2.bf16.msra.mxu0 0
      %1432 = vmatprep.mubr.bf16.mxu0 0
      %1433 = vmatmul.mubr.bf16.gmra.mxu0 %v841
      %v1434 = vpop.f32.mrf.mxu0
      %v1435 = vadd.f32 %v1370, %v1434
      %v1436 = vpop.f32.mrf.mxu0
      %v1437 = vpop.f32.mrf.mxu0
      %v1438 = vadd.f32 %v1373, %v1437
      %v1439 = vpop.f32.mrf.mxu0
      %1440 = vmatprep.mubr.bf16.mxu0 0
      %1441 = vmatmul.mubr.bf16.gmra.mxu0 %v844
      %v1442 = vpop.f32.mrf.mxu0
      %v1443 = vadd.f32 %v1378, %v1442
      %v1444 = vpop.f32.mrf.mxu0
      %v1445 = vpop.f32.mrf.mxu0
      %v1446 = vadd.f32 %v1381, %v1445
      %v1447 = vpop.f32.mrf.mxu0
      %1448 = vmatprep.mubr.bf16.mxu0 0
      %1449 = vmatmul.mubr.bf16.gmra.mxu0 %v847
      %v1450 = vpop.f32.mrf.mxu0
      %v1451 = vadd.f32 %v1386, %v1450
      %v1452 = vpop.f32.mrf.mxu0
      %v1453 = vpop.f32.mrf.mxu0
      %v1454 = vadd.f32 %v1389, %v1453
      %v1455 = vpop.f32.mrf.mxu0
      %1456 = vmatprep.mubr.bf16.mxu0 0
      %1457 = vmatmul.mubr.bf16.gmra.mxu0 %v1187
      %v1458 = vpop.f32.mrf.mxu0
      %v1459 = vadd.f32 %v1394, %v1458
      %v1460 = vpop.f32.mrf.mxu0
      %v1461 = vpop.f32.mrf.mxu0
      %v1462 = vadd.f32 %v1397, %v1461
      %v1463 = vpop.f32.mrf.mxu0
      %1464 = vdwg.mxu0
      %v1465 = vadd.f32 %v1104, %v1435
      %v1466 = vadd.f32 %v1107, %v1438
      %v1467 = vadd.f32 %v1112, %v1443
      %v1468 = vadd.f32 %v1115, %v1446
      %v1469 = vadd.f32 %v1120, %v1451
      %v1470 = vadd.f32 %v1123, %v1454
      %v1471 = vadd.f32 %v1128, %v1459
      %v1472 = vadd.f32 %v1131, %v1462
      %v1473 = vld [vmem:[%s2] sm:$0x1]
      %v1475 = vlaneseq
      %v1476 = vshrl.u32 %v1475, 7
      %v1477 = vsub.s32 0, %v1476
      %v1478 = vrot.slane %v1473, %v1477
      %v1480 = vadd.f32 %v1465, %v1478
      %v1481 = vadd.f32 %v1466, %v1478
      %v1482 = vadd.f32 %v1467, %v1478
      %v1483 = vadd.f32 %v1468, %v1478
      %v1484 = vadd.f32 %v1469, %v1478
      %v1485 = vadd.f32 %v1470, %v1478
      %v1486 = vadd.f32 %v1471, %v1478
      %v1487 = vadd.f32 %v1472, %v1478
      %v1488 = vmax.f32 %v1480, 0.0
      %v1489 = vmax.f32 %v1481, 0.0
      %v1490 = vmax.f32 %v1482, 0.0
      %v1491 = vmax.f32 %v1483, 0.0
      %v1492 = vmax.f32 %v1484, 0.0
      %v1493 = vmax.f32 %v1485, 0.0
      %v1494 = vmax.f32 %v1486, 0.0
      %v1495 = vmax.f32 %v1487, 0.0
      %v1496 = vpack.c.bf16 %v1489, %v1488
      %v1497 = vpack.c.bf16 %v1491, %v1490
      %v1498 = vpack.c.bf16 %v1493, %v1492
      %v1499 = vpack.c.bf16 %v1495, %v1494
      %v1500 = vld [vmem:[%s3] sm:$0xf]
      %v1501 = vld [vmem:[%s3 + $0x4] sm:$0xf]
      %v1502 = vld [vmem:[%s3 + $0x8] sm:$0xf]
      %v1503 = vld [vmem:[%s3 + $0xc] sm:$0xf]
      %v1504 = vld [vmem:[%s3 + $0x10] sm:$0xf]
      %v1505 = vld [vmem:[%s3 + $0x14] sm:$0xf]
      %v1506 = vld [vmem:[%s3 + $0x18] sm:$0xf]
      %v1507 = vld [vmem:[%s3 + $0x1c] sm:$0xf]
      %v1508 = vld [vmem:[%s3 + $0x20] sm:$0xf]
      %v1509 = vld [vmem:[%s3 + $0x24] sm:$0xf]
      %v1510 = vld [vmem:[%s3 + $0x28] sm:$0xf]
      %v1511 = vld [vmem:[%s3 + $0x2c] sm:$0xf]
      %v1512 = vld [vmem:[%s3 + $0x30] sm:$0xf]
      %v1513 = vld [vmem:[%s3 + $0x34] sm:$0xf]
      %v1514 = vld [vmem:[%s3 + $0x38] sm:$0xf]
      %v1515 = vld [vmem:[%s3 + $0x3c] sm:$0xf]
      %v1516 = vld [vmem:[%s4] sm:$0x1]
      %v1518 = vlaneseq
      %v1519 = vshrl.u32 %v1518, 7
      %v1520 = vsub.s32 0, %v1519
      %v1521 = vrot.slane %v1516, %v1520
      %v1539 = vunpack.c.l.b16 %v1500
      %v1540 = vunpack.c.l.b16 %v1501
      %v1541 = vunpack.c.l.b16 %v1502
      %v1542 = vunpack.c.l.b16 %v1503
      %v1543 = vunpack.c.l.b16 %v1504
      %v1544 = vunpack.c.l.b16 %v1505
      %v1545 = vunpack.c.l.b16 %v1506
      %v1546 = vunpack.c.l.b16 %v1507
      %v1547 = vunpack.c.l.b16 %v1508
      %v1548 = vunpack.c.l.b16 %v1509
      %v1549 = vunpack.c.l.b16 %v1510
      %v1550 = vunpack.c.l.b16 %v1511
      %v1551 = vunpack.c.l.b16 %v1512
      %v1552 = vunpack.c.l.b16 %v1513
      %v1553 = vunpack.c.l.b16 %v1514
      %v1554 = vunpack.c.l.b16 %v1515
      %v1555 = vpack.c.b16 %v1540, %v1539
      %v1556 = vpack.c.b16 %v1542, %v1541
      %v1557 = vpack.c.b16 %v1544, %v1543
      %v1558 = vpack.c.b16 %v1546, %v1545
      %v1559 = vpack.c.b16 %v1548, %v1547
      %v1560 = vpack.c.b16 %v1550, %v1549
      %v1561 = vpack.c.b16 %v1552, %v1551
      %v1562 = vpack.c.b16 %v1554, %v1553
      %1571 = vmatprep.subr.bf16.mxu0 0
      %1572 = vmatpush1.bf16.msra.mxu0 %v1562
      %1573 = vmatprep.subr.bf16.mxu0 0
      %1574 = vmatpush1.bf16.msra.mxu0 %v1561
      %1575 = vmatprep.subr.bf16.mxu0 0
      %1576 = vmatpush1.bf16.msra.mxu0 %v1560
      %1577 = vmatprep.subr.bf16.mxu0 0
      %1578 = vmatpush1.bf16.msra.mxu0 %v1559
      %1579 = vmatprep.subr.bf16.mxu0 0
      %1580 = vmatpush1.bf16.msra.mxu0 %v1558
      %1581 = vmatprep.subr.bf16.mxu0 0
      %1582 = vmatpush1.bf16.msra.mxu0 %v1557
      %1583 = vmatprep.subr.bf16.mxu0 0
      %1584 = vmatpush1.bf16.msra.mxu0 %v1556
      %1585 = vmatprep.subr.bf16.mxu0 0
      %1586 = vmatpush1.bf16.msra.mxu0 %v1555
      %1587 = vmatprep.subr.bf16.mxu0 0
      %1588 = vmatpush2.bf16.msra.mxu0 0
      %1589 = vmatprep.subr.bf16.mxu0 0
      %1590 = vmatpush2.bf16.msra.mxu0 0
      %1591 = vmatprep.subr.bf16.mxu0 0
      %1592 = vmatpush2.bf16.msra.mxu0 0
      %1593 = vmatprep.subr.bf16.mxu0 0
      %1594 = vmatpush2.bf16.msra.mxu0 0
      %1595 = vmatprep.subr.bf16.mxu0 0
      %1596 = vmatpush2.bf16.msra.mxu0 0
      %1597 = vmatprep.subr.bf16.mxu0 0
      %1598 = vmatpush2.bf16.msra.mxu0 0
      %1599 = vmatprep.subr.bf16.mxu0 0
      %1600 = vmatpush2.bf16.msra.mxu0 0
      %1601 = vmatprep.subr.bf16.mxu0 0
      %1602 = vmatpush2.bf16.msra.mxu0 0
      %1603 = vmatprep.mubr.bf16.mxu0 0
      %1604 = vmatmul.mubr.bf16.gmra.mxu0 %v1496
      %v1605 = vpop.f32.mrf.mxu0
      %v1606 = vadd.f32 %v1521, %v1605
      %v1607 = vpop.f32.mrf.mxu0
      %v1608 = vpop.f32.mrf.mxu0
      %v1609 = vadd.f32 %v1521, %v1608
      %v1610 = vpop.f32.mrf.mxu0
      %1611 = vmatprep.mubr.bf16.mxu0 0
      %1612 = vmatmul.mubr.bf16.gmra.mxu0 %v1497
      %v1613 = vpop.f32.mrf.mxu0
      %v1614 = vadd.f32 %v1521, %v1613
      %v1615 = vpop.f32.mrf.mxu0
      %v1616 = vpop.f32.mrf.mxu0
      %v1617 = vadd.f32 %v1521, %v1616
      %v1618 = vpop.f32.mrf.mxu0
      %1619 = vmatprep.mubr.bf16.mxu0 0
      %1620 = vmatmul.mubr.bf16.gmra.mxu0 %v1498
      %v1621 = vpop.f32.mrf.mxu0
      %v1622 = vadd.f32 %v1521, %v1621
      %v1623 = vpop.f32.mrf.mxu0
      %v1624 = vpop.f32.mrf.mxu0
      %v1625 = vadd.f32 %v1521, %v1624
      %v1626 = vpop.f32.mrf.mxu0
      %1627 = vmatprep.mubr.bf16.mxu0 0
      %1628 = vmatmul.mubr.bf16.gmra.mxu0 %v1499
      %v1629 = vpop.f32.mrf.mxu0
      %v1630 = vadd.f32 %v1521, %v1629
      %v1631 = vpop.f32.mrf.mxu0
      %v1632 = vpop.f32.mrf.mxu0
      %v1633 = vadd.f32 %v1521, %v1632
      %v1634 = vpop.f32.mrf.mxu0
      %1635 = vdwg.mxu0
      %v1636 = vld [vmem:[%s266] sm:$0xf]
      %v1637 = vld [vmem:[%s266 + $0x4] sm:$0xf]
      %v1638 = vld [vmem:[%s266 + $0x8] sm:$0xf]
      %v1639 = vld [vmem:[%s266 + $0xc] sm:$0xf]
      %v1640 = vld [vmem:[%s266 + $0x10] sm:$0xf]
      %v1641 = vld [vmem:[%s266 + $0x14] sm:$0xf]
      %v1642 = vld [vmem:[%s266 + $0x18] sm:$0xf]
      %v1643 = vld [vmem:[%s266 + $0x1c] sm:$0xf]
      %v1644 = vunpack.c.l.bf16 %v1636
      %v1645 = vunpack.c.l.bf16 %v1637
      %v1646 = vunpack.c.l.bf16 %v1638
      %v1647 = vunpack.c.l.bf16 %v1639
      %v1648 = vunpack.c.l.bf16 %v1640
      %v1649 = vunpack.c.l.bf16 %v1641
      %v1650 = vunpack.c.l.bf16 %v1642
      %v1651 = vunpack.c.l.bf16 %v1643
      %v1652 = vadd.f32 %v1606, %v1644
      %v1653 = vadd.f32 %v1609, %v1645
      %v1654 = vadd.f32 %v1614, %v1646
      %v1655 = vadd.f32 %v1617, %v1647
      %v1656 = vadd.f32 %v1622, %v1648
      %v1657 = vadd.f32 %v1625, %v1649
      %v1658 = vadd.f32 %v1630, %v1650
      %v1659 = vadd.f32 %v1633, %v1651
      %v1660 = vmax.f32 %v1652, 0.0
      %v1661 = vmax.f32 %v1653, 0.0
      %v1662 = vmax.f32 %v1654, 0.0
      %v1663 = vmax.f32 %v1655, 0.0
      %v1664 = vmax.f32 %v1656, 0.0
      %v1665 = vmax.f32 %v1657, 0.0
      %v1666 = vmax.f32 %v1658, 0.0
      %v1667 = vmax.f32 %v1659, 0.0
      %1668 = vst [vmem:[%s271] sm:$0xff] %v1660
      %1669 = vst [vmem:[%s271 + $0x8] sm:$0xff] %v1661
      %1670 = vst [vmem:[%s271 + $0x10] sm:$0xff] %v1662
      %1671 = vst [vmem:[%s271 + $0x18] sm:$0xff] %v1663
      %1672 = vst [vmem:[%s271 + $0x20] sm:$0xff] %v1664
      %1673 = vst [vmem:[%s271 + $0x28] sm:$0xff] %v1665
      %1674 = vst [vmem:[%s271 + $0x30] sm:$0xff] %v1666
      %1675 = vst [vmem:[%s271 + $0x38] sm:$0xff] %v1667
      %p1676 = scmp.lt.s32.totalorder %s17, 1
      %s1677 = scalar_select %p1676, %s17, 1
      %s1678 = smul.addr %s1677, 8
      %s1679 = smul.addr %s1678, 8
      %s1680 = scalar_lea.vmem %s6, %s1679
      // Predicated region
      $region45: #{resnet_bottleneck_forward.3} parent=43 // pred_check
        %p1681 = pneg %p171
      $region46: #{resnet_bottleneck_forward.3} parent=43 // pred_check_branch
        %1683 = sbr.rel (%p1681) target = $region48
      $region47: #{resnet_bottleneck_forward.3} parent=43 // pred_region
        _
      $region48: #{resnet_bottleneck_forward.3} parent=43 // pred_fallthru
        _
    $region44: #{resnet_bottleneck_forward.3} parent=5 // pred_fallthru
      _
    %p1684 = scmp.le.s32.totalorder 2, %s12
    // Predicated region
    $region49: #{resnet_bottleneck_forward.3} parent=5 // pred_check
      %p1685 = pneg %p1684
    $region50: #{resnet_bottleneck_forward.3} parent=5 // pred_check_branch
      %1687 = sbr.rel (%p1685) target = $region52
    $region51: #{resnet_bottleneck_forward.3} parent=5 // pred_region
      %s1688 = ssub.s32 %s12, 2
      // Predicated region
      $region53: #{resnet_bottleneck_forward.3} parent=51 // pred_check
        %p1689 = pneg %p177
      $region54: #{resnet_bottleneck_forward.3} parent=51 // pred_check_branch
        %1691 = sbr.rel (%p1689) target = $region56
      $region55: #{resnet_bottleneck_forward.3} parent=51 // pred_region
        %p1692 = scmp.lt.s32.totalorder %s18, 1
        %s1693 = scalar_select %p1692, %s18, 1
        %s1694 = smul.addr %s1693, 8
        %s1695 = smul.addr %s1694, 8
        %s1696 = scalar_lea.vmem %s6, %s1695
      $region56: #{resnet_bottleneck_forward.3} parent=51 // pred_fallthru
        _
    $region52: #{resnet_bottleneck_forward.3} parent=5 // pred_fallthru
      _
  $region6: #{resnet_bottleneck_forward.3} parent=0 // loop_footer
    %s16 = sadd.s32 1, %s12
  $region7: #{resnet_bottleneck_forward.3} parent=0 // loop_footer_branch
    %11 = sbr.rel target = $region3
  $region8: #{resnet_bottleneck_forward.3} parent=0 // loop_exit
    _

</llo_original>
